<compile_context>
chip_gen: v7x
topology: tpu7x:2x2x1
jax: 0.10.0
libtpu: 0.0.40
codegen_flags: <defaults>
</compile_context>

<pallas_src>
import functools

import jax
import jax.numpy as jnp
from jax import lax
from jax.experimental import pallas as pl
from jax.experimental.pallas import tpu as pltpu
import numpy as np


def bilstm_kernel(x_ref,        # [T*Bp, 2I] bf16  (cols: [x_t | x_{T-1-t}])
                  wih_ref,      # [2I, 8H]   bf16  block-structured input proj
                  bih_ref,      # [1, 8H]    f32   summed biases, both dirs
                  whh_ref,      # [2H, 8H]   bf16  block-diagonal recurrent W
                  wlin_f_ref,   # [H, Op]    bf16  head weights (fwd rows)
                  wlin_b_ref,   # [H, Op]    bf16  head weights (bwd rows)
                  blin_ref,     # [1, Op]    f32
                  out_ref,      # [T*Bp, Op] f32
                  xg_all,       # scratch [T*Bp, 8H] f32  hoisted input proj
                  hf_all,       # scratch [T*Bp, H]  f32  fwd h history
                  hb_all,       # scratch [T*Bp, H]  f32  bwd h history
                  *, T, Bp, H):
    G2 = 2 * H   # per-gate width across both directions

    # ---- Prologue: hoisted input projection for BOTH directions, one bf16
    # MXU matmul (bias folded in).  Row block s already holds the combined
    # [fwd gates @ time s | bwd gates @ time T-1-s] pre-activations because
    # the wrapper concatenated x_t with x_{T-1-t} along features.
    xg_all[...] = (jnp.dot(x_ref[...], wih_ref[...],
                           preferred_element_type=jnp.float32)
                   + bih_ref[...])

    whh = whh_ref[...]                                   # bf16, stays in vregs

    zeros = jnp.zeros((Bp, 2 * H), jnp.float32)

    # ---- Fused fwd/bwd recurrence: one block-diagonal recurrent matmul per
    # step; gates come out as contiguous 2H-wide i|f|g|o groups.
    def step(s, carry):
        h, c = carry
        row_f = pl.multiple_of(s * Bp, Bp)                # fwd time index s
        row_b = pl.multiple_of((T - 1 - s) * Bp, Bp)      # bwd time index T-1-s

        gates = xg_all[pl.ds(row_f, Bp), :] + jnp.dot(
            h.astype(jnp.bfloat16), whh,
            preferred_element_type=jnp.float32)           # [Bp, 8H]

        sif = jax.nn.sigmoid(gates[:, :2 * G2])           # i|f (full vreg)
        g_g = jnp.tanh(gates[:, 2 * G2:3 * G2])           # g
        o_g = jax.nn.sigmoid(gates[:, 3 * G2:])           # o
        i_g = sif[:, :G2]
        f_g = sif[:, G2:]

        c = f_g * c + i_g * g_g
        h = o_g * jnp.tanh(c)

        hf_all[pl.ds(row_f, Bp), :] = h[:, :H]            # fwd output @ t = s
        hb_all[pl.ds(row_b, Bp), :] = h[:, H:]            # bwd output @ t = T-1-s
        return (h, c)

    # Full unroll is right for short fixed T; bound it once T grows.
    lax.fori_loop(0, T, step, (zeros, zeros), unroll=True)

    # ---- Epilogue: Linear head on concat([h_fwd, h_bwd]) as two large
    # [T*Bp, H] @ [H, Op] bf16 matmuls (flat operands, zero repack),
    # lane-dense f32 output store.
    out_ref[...] = (
        jnp.dot(hf_all[...].astype(jnp.bfloat16), wlin_f_ref[...],
                preferred_element_type=jnp.float32)
        + jnp.dot(hb_all[...].astype(jnp.bfloat16), wlin_b_ref[...],
                  preferred_element_type=jnp.float32)
        + blin_ref[...])


def _fuse_directions(w_f, w_b, rows, H):
    """Build the block-structured [2*rows, 8H] matrix with gate columns laid
    out as i_f|i_b|f_f|f_b|g_f|g_b|o_f|o_b; fwd rows feed only *_f columns,
    bwd rows feed only *_b columns."""
    wf = w_f.reshape(rows, 4, 1, H)
    wb = w_b.reshape(rows, 4, 1, H)
    top = jnp.concatenate([wf, jnp.zeros_like(wf)], axis=2).reshape(rows, 8 * H)
    bot = jnp.concatenate([jnp.zeros_like(wb), wb], axis=2).reshape(rows, 8 * H)
    return jnp.concatenate([top, bot], axis=0)


def bidirectional_lstm(x, params):
    """x: [B, T, I] float32 -> [B, T, O] float32 (matches the PyTorch module)."""
    B, T, I = x.shape
    H = params['whh_f'].shape[0]
    O = params['wlin'].shape[1]

    SUB, LANE = 8, 128
    Bp = max(SUB, ((B + SUB - 1) // SUB) * SUB)      # pad batch to f32 sublanes
    Op = max(LANE, ((O + LANE - 1) // LANE) * LANE)  # lane-dense output width

    # Pad batch with zero rows (sliced away afterwards), go time-major, and
    # build the combined input [x_t | x_{T-1-t}] so one matmul produces both
    # directions' gate pre-activations in the fused column layout.
    x_p = jnp.pad(x, ((0, Bp - B), (0, 0), (0, 0)))
    x_tm = jnp.transpose(x_p, (1, 0, 2))                       # [T, Bp, I]
    x_comb = jnp.concatenate([x_tm, x_tm[::-1]], axis=-1)      # [T, Bp, 2I]
    x_comb = x_comb.reshape(T * Bp, 2 * I).astype(jnp.bfloat16)

    # Block-structured input projection [2I, 8H] and block-diagonal W_hh
    # [2H, 8H], both bf16; combined bias [1, 8H] f32.
    wih_comb = _fuse_directions(params['wih_f'], params['wih_b'],
                                I, H).astype(jnp.bfloat16)
    whh_bd = _fuse_directions(params['whh_f'], params['whh_b'],
                              H, H).astype(jnp.bfloat16)
    bf = params['b_f'].reshape(4, 1, H)
    bb = params['b_b'].reshape(4, 1, H)
    bih = jnp.concatenate([bf, bb], axis=1).reshape(1, 8 * H)

    # Split + zero-pad the linear head to the lane-dense width.
    wlin_p = jnp.pad(params['wlin'], ((0, 0), (0, Op - O)))
    wlin_f = wlin_p[:H].astype(jnp.bfloat16)                   # [H, Op]
    wlin_b = wlin_p[H:].astype(jnp.bfloat16)                   # [H, Op]
    blin = jnp.pad(params['blin'], ((0, 0), (0, Op - O)))

    kernel = functools.partial(bilstm_kernel, T=T, Bp=Bp, H=H)
    vmem = pl.BlockSpec(memory_space=pltpu.MemorySpace.VMEM)

    out_flat = pl.pallas_call(
        kernel,
        out_shape=jax.ShapeDtypeStruct((T * Bp, Op), jnp.float32),
        in_specs=[vmem] * 7,
        out_specs=vmem,
        scratch_shapes=[pltpu.VMEM((T * Bp, 8 * H), jnp.float32),
                        pltpu.VMEM((T * Bp, H), jnp.float32),
                        pltpu.VMEM((T * Bp, H), jnp.float32)],
        compiler_params=pltpu.CompilerParams(
            vmem_limit_bytes=32 * 1024 * 1024),
    )(x_comb, wih_comb, bih, whh_bd, wlin_f, wlin_b, blin)

    # [T*Bp, Op] -> [B, T, O]
    out_tm = out_flat.reshape(T, Bp, Op)
    return jnp.transpose(out_tm, (1, 0, 2))[:B, :, :O]


def init_params(key, input_size, hidden_size, output_size):
    """Deterministic init matching PyTorch shapes (uniform(-1/sqrt(H), 1/sqrt(H)))."""
    H, I, O = hidden_size, input_size, output_size
    k = 1.0 / np.sqrt(H)
    keys = jax.random.split(key, 10)
    u = lambda kk, shape: jax.random.uniform(kk, shape, jnp.float32, -k, k)
    # PyTorch: weight_ih [4H, I], weight_hh [4H, H], bias_ih [4H], bias_hh [4H]
    # Passed transposed; the two biases are pre-summed.
    params = {
        'wih_f': u(keys[0], (4 * H, I)).T,
        'whh_f': u(keys[1], (4 * H, H)).T,
        'b_f':   (u(keys[2], (4 * H,)) + u(keys[3], (4 * H,)))[None, :],
        'wih_b': u(keys[4], (4 * H, I)).T,
        'whh_b': u(keys[5], (4 * H, H)).T,
        'b_b':   (u(keys[6], (4 * H,)) + u(keys[7], (4 * H,)))[None, :],
        'wlin':  u(keys[8], (O, 2 * H)).T,
        'blin':  u(keys[9], (O,))[None, :],
    }
    return params


def bidirectional_lstm_ref(x, params):
    """Pure-JAX f32 reference (same math as the PyTorch module)."""
    B, T, _ = x.shape
    H = params['whh_f'].shape[0]

    def run(x_seq, wih, whh, b):
        def step(carry, x_t):
            h, c = carry
            gates = x_t @ wih + h @ whh + b
            i_g = jax.nn.sigmoid(gates[:, :H])
            f_g = jax.nn.sigmoid(gates[:, H:2 * H])
            g_g = jnp.tanh(gates[:, 2 * H:3 * H])
            o_g = jax.nn.sigmoid(gates[:, 3 * H:])
            c = f_g * c + i_g * g_g
            h = o_g * jnp.tanh(c)
            return (h, c), h
        init = (jnp.zeros((B, H), jnp.float32), jnp.zeros((B, H), jnp.float32))
        _, hs = lax.scan(step, init, x_seq)
        return hs  # [T, B, H]

    x_tm = jnp.transpose(x, (1, 0, 2))
    hf = run(x_tm, params['wih_f'], params['whh_f'], params['b_f'])
    hb = run(x_tm[::-1], params['wih_b'], params['whh_b'], params['b_b'])[::-1]
    rec = jnp.concatenate([hf, hb], axis=-1)                       # [T, B, 2H]
    out = jnp.einsum('tbk,ko->tbo', rec, params['wlin']) + params['blin']
    return jnp.transpose(out, (1, 0, 2))


if __name__ == "__main__":
    B, T, INPUT, HIDDEN, OUTPUT = 2, 8, 16, 32, 16

    key = jax.random.PRNGKey(0)
    k_x, k_p = jax.random.split(key)
    x = jax.random.normal(k_x, (B, T, INPUT), jnp.float32)
    params = init_params(k_p, INPUT, HIDDEN, OUTPUT)

    out = bidirectional_lstm(x, params)
    out = jax.block_until_ready(out)

    ref = jax.block_until_ready(bidirectional_lstm_ref(x, params))
    assert out.shape == (B, T, OUTPUT), out.shape
    max_err = float(jnp.max(jnp.abs(out - ref)))
    assert max_err < 3e-2, f"mismatch vs reference: {max_err}"

    print("KERNEL_OK")
</pallas_src>

<mosaic_0001>
module attributes {stable_mosaic.version = 11 : i64} {
  func.func @bilstm_kernel(%arg0: memref<64x32xbf16, #tpu.memory_space<vmem>>, %arg1: memref<32x256xbf16, #tpu.memory_space<vmem>>, %arg2: memref<1x256xf32, #tpu.memory_space<vmem>>, %arg3: memref<64x256xbf16, #tpu.memory_space<vmem>>, %arg4: memref<32x128xbf16, #tpu.memory_space<vmem>>, %arg5: memref<32x128xbf16, #tpu.memory_space<vmem>>, %arg6: memref<1x128xf32, #tpu.memory_space<vmem>>, %arg7: memref<64x128xf32, #tpu.memory_space<vmem>>, %arg8: memref<64x256xf32, #tpu.memory_space<vmem>>, %arg9: memref<64x32xf32, #tpu.memory_space<vmem>>, %arg10: memref<64x32xf32, #tpu.memory_space<vmem>>) attributes {dimension_semantics = [], scalar_prefetch = 0 : i64, scratch_operands = 3 : i64, tpu.core_type = #tpu.core_type<tc>} {
    %c0 = arith.constant 0 : index
    %c0_0 = arith.constant 0 : index
    %0 = vector.load %arg0[%c0, %c0_0] : memref<64x32xbf16, #tpu.memory_space<vmem>>, vector<64x32xbf16>
    %c0_1 = arith.constant 0 : index
    %c0_2 = arith.constant 0 : index
    %1 = vector.load %arg1[%c0_1, %c0_2] : memref<32x256xbf16, #tpu.memory_space<vmem>>, vector<32x256xbf16>
    %cst = arith.constant dense<0.000000e+00> : vector<64x256xf32>
    %2 = tpu.matmul %0, %1, %cst {dimension_numbers = #tpu.dot_dimension_numbers<[1], [0], [0], [1], [0, 0, 1, 1], [], []>} : vector<64x32xbf16>, vector<32x256xbf16>, vector<64x256xf32> -> vector<64x256xf32>
    %c0_3 = arith.constant 0 : index
    %c0_4 = arith.constant 0 : index
    %3 = vector.load %arg2[%c0_3, %c0_4] : memref<1x256xf32, #tpu.memory_space<vmem>>, vector<1x256xf32>
    %4 = vector.broadcast %3 : vector<1x256xf32> to vector<64x256xf32>
    %5 = arith.addf %2, %4 : vector<64x256xf32>
    %c0_5 = arith.constant 0 : index
    %c0_6 = arith.constant 0 : index
    %6 = vector.load %arg8[%c0_5, %c0_6] : memref<64x256xf32, #tpu.memory_space<vmem>>, vector<64x256xf32>
    tpu.vector_store %arg8[%c0_5, %c0_6], %5 {strides = array<i32>} : memref<64x256xf32, #tpu.memory_space<vmem>>, vector<64x256xf32>,
    %c0_7 = arith.constant 0 : index
    %c0_8 = arith.constant 0 : index
    %7 = vector.load %arg3[%c0_7, %c0_8] : memref<64x256xbf16, #tpu.memory_space<vmem>>, vector<64x256xbf16>
    %cst_9 = arith.constant 0.000000e+00 : f32
    %8 = vector.broadcast %cst_9 : f32 to vector<8x64xf32>
    %c0_i32 = arith.constant 0 : i32
    %c8_i32 = arith.constant 8 : i32
    %9 = arith.muli %c0_i32, %c8_i32 : i32
    %10 = tpu.assume_multiple %9, 8 : i32
    %c7_i32 = arith.constant 7 : i32
    %11 = arith.subi %c7_i32, %c0_i32 : i32
    %c8_i32_10 = arith.constant 8 : i32
    %12 = arith.muli %11, %c8_i32_10 : i32
    %13 = tpu.assume_multiple %12, 8 : i32
    %14 = arith.index_cast %10 : i32 to index
    %c0_11 = arith.constant 0 : index
    %15 = vector.load %arg8[%14, %c0_11] : memref<64x256xf32, #tpu.memory_space<vmem>>, vector<8x256xf32>
    %16 = arith.truncf %8 : vector<8x64xf32> to vector<8x64xbf16>
    %cst_12 = arith.constant dense<0.000000e+00> : vector<8x256xf32>
    %17 = tpu.matmul %16, %7, %cst_12 {dimension_numbers = #tpu.dot_dimension_numbers<[1], [0], [0], [1], [0, 0, 1, 1], [], []>} : vector<8x64xbf16>, vector<64x256xbf16>, vector<8x256xf32> -> vector<8x256xf32>
    %18 = arith.addf %15, %17 : vector<8x256xf32>
    %19 = vector.extract_strided_slice %18 {offsets = [0, 0], sizes = [8, 128], strides = [1, 1]} : vector<8x256xf32> to vector<8x128xf32>
    %20 = arith.negf %19 : vector<8x128xf32>
    %21 = math.exp %20 : vector<8x128xf32>
    %cst_13 = arith.constant 1.000000e+00 : f32
    %22 = vector.broadcast %cst_13 : f32 to vector<8x128xf32>
    %23 = arith.addf %22, %21 : vector<8x128xf32>
    %24 = arith.divf %22, %23 : vector<8x128xf32>
    %25 = vector.extract_strided_slice %18 {offsets = [0, 128], sizes = [8, 64], strides = [1, 1]} : vector<8x256xf32> to vector<8x64xf32>
    %26 = math.tanh %25 : vector<8x64xf32>
    %27 = vector.extract_strided_slice %18 {offsets = [0, 192], sizes = [8, 64], strides = [1, 1]} : vector<8x256xf32> to vector<8x64xf32>
    %28 = arith.negf %27 : vector<8x64xf32>
    %29 = math.exp %28 : vector<8x64xf32>
    %cst_14 = arith.constant 1.000000e+00 : f32
    %30 = vector.broadcast %cst_14 : f32 to vector<8x64xf32>
    %31 = arith.addf %30, %29 : vector<8x64xf32>
    %32 = arith.divf %30, %31 : vector<8x64xf32>
    %33 = vector.extract_strided_slice %24 {offsets = [0, 0], sizes = [8, 64], strides = [1, 1]} : vector<8x128xf32> to vector<8x64xf32>
    %34 = vector.extract_strided_slice %24 {offsets = [0, 64], sizes = [8, 64], strides = [1, 1]} : vector<8x128xf32> to vector<8x64xf32>
    %35 = arith.mulf %34, %8 : vector<8x64xf32>
    %36 = arith.mulf %33, %26 : vector<8x64xf32>
    %37 = arith.addf %35, %36 : vector<8x64xf32>
    %38 = math.tanh %37 : vector<8x64xf32>
    %39 = arith.mulf %32, %38 : vector<8x64xf32>
    %40 = vector.extract_strided_slice %39 {offsets = [0, 0], sizes = [8, 32], strides = [1, 1]} : vector<8x64xf32> to vector<8x32xf32>
    %41 = arith.index_cast %10 : i32 to index
    %c0_15 = arith.constant 0 : index
    %42 = vector.load %arg9[%41, %c0_15] : memref<64x32xf32, #tpu.memory_space<vmem>>, vector<8x32xf32>
    tpu.vector_store %arg9[%41, %c0_15], %40 {strides = array<i32>} : memref<64x32xf32, #tpu.memory_space<vmem>>, vector<8x32xf32>,
    %43 = vector.extract_strided_slice %39 {offsets = [0, 32], sizes = [8, 32], strides = [1, 1]} : vector<8x64xf32> to vector<8x32xf32>
    %44 = arith.index_cast %13 : i32 to index
    %c0_16 = arith.constant 0 : index
    %45 = vector.load %arg10[%44, %c0_16] : memref<64x32xf32, #tpu.memory_space<vmem>>, vector<8x32xf32>
    tpu.vector_store %arg10[%44, %c0_16], %43 {strides = array<i32>} : memref<64x32xf32, #tpu.memory_space<vmem>>, vector<8x32xf32>,
    %c1_i32 = arith.constant 1 : i32
    %c8_i32_17 = arith.constant 8 : i32
    %46 = arith.muli %c1_i32, %c8_i32_17 : i32
    %47 = tpu.assume_multiple %46, 8 : i32
    %c7_i32_18 = arith.constant 7 : i32
    %48 = arith.subi %c7_i32_18, %c1_i32 : i32
    %c8_i32_19 = arith.constant 8 : i32
    %49 = arith.muli %48, %c8_i32_19 : i32
    %50 = tpu.assume_multiple %49, 8 : i32
    %51 = arith.index_cast %47 : i32 to index
    %c0_20 = arith.constant 0 : index
    %52 = vector.load %arg8[%51, %c0_20] : memref<64x256xf32, #tpu.memory_space<vmem>>, vector<8x256xf32>
    %53 = arith.truncf %39 : vector<8x64xf32> to vector<8x64xbf16>
    %cst_21 = arith.constant dense<0.000000e+00> : vector<8x256xf32>
    %54 = tpu.matmul %53, %7, %cst_21 {dimension_numbers = #tpu.dot_dimension_numbers<[1], [0], [0], [1], [0, 0, 1, 1], [], []>} : vector<8x64xbf16>, vector<64x256xbf16>, vector<8x256xf32> -> vector<8x256xf32>
    %55 = arith.addf %52, %54 : vector<8x256xf32>
    %56 = vector.extract_strided_slice %55 {offsets = [0, 0], sizes = [8, 128], strides = [1, 1]} : vector<8x256xf32> to vector<8x128xf32>
    %57 = arith.negf %56 : vector<8x128xf32>
    %58 = math.exp %57 : vector<8x128xf32>
    %cst_22 = arith.constant 1.000000e+00 : f32
    %59 = vector.broadcast %cst_22 : f32 to vector<8x128xf32>
    %60 = arith.addf %59, %58 : vector<8x128xf32>
    %61 = arith.divf %59, %60 : vector<8x128xf32>
    %62 = vector.extract_strided_slice %55 {offsets = [0, 128], sizes = [8, 64], strides = [1, 1]} : vector<8x256xf32> to vector<8x64xf32>
    %63 = math.tanh %62 : vector<8x64xf32>
    %64 = vector.extract_strided_slice %55 {offsets = [0, 192], sizes = [8, 64], strides = [1, 1]} : vector<8x256xf32> to vector<8x64xf32>
    %65 = arith.negf %64 : vector<8x64xf32>
    %66 = math.exp %65 : vector<8x64xf32>
    %cst_23 = arith.constant 1.000000e+00 : f32
    %67 = vector.broadcast %cst_23 : f32 to vector<8x64xf32>
    %68 = arith.addf %67, %66 : vector<8x64xf32>
    %69 = arith.divf %67, %68 : vector<8x64xf32>
    %70 = vector.extract_strided_slice %61 {offsets = [0, 0], sizes = [8, 64], strides = [1, 1]} : vector<8x128xf32> to vector<8x64xf32>
    %71 = vector.extract_strided_slice %61 {offsets = [0, 64], sizes = [8, 64], strides = [1, 1]} : vector<8x128xf32> to vector<8x64xf32>
    %72 = arith.mulf %71, %37 : vector<8x64xf32>
    %73 = arith.mulf %70, %63 : vector<8x64xf32>
    %74 = arith.addf %72, %73 : vector<8x64xf32>
    %75 = math.tanh %74 : vector<8x64xf32>
    %76 = arith.mulf %69, %75 : vector<8x64xf32>
    %77 = vector.extract_strided_slice %76 {offsets = [0, 0], sizes = [8, 32], strides = [1, 1]} : vector<8x64xf32> to vector<8x32xf32>
    %78 = arith.index_cast %47 : i32 to index
    %c0_24 = arith.constant 0 : index
    %79 = vector.load %arg9[%78, %c0_24] : memref<64x32xf32, #tpu.memory_space<vmem>>, vector<8x32xf32>
    tpu.vector_store %arg9[%78, %c0_24], %77 {strides = array<i32>} : memref<64x32xf32, #tpu.memory_space<vmem>>, vector<8x32xf32>,
    %80 = vector.extract_strided_slice %76 {offsets = [0, 32], sizes = [8, 32], strides = [1, 1]} : vector<8x64xf32> to vector<8x32xf32>
    %81 = arith.index_cast %50 : i32 to index
    %c0_25 = arith.constant 0 : index
    %82 = vector.load %arg10[%81, %c0_25] : memref<64x32xf32, #tpu.memory_space<vmem>>, vector<8x32xf32>
    tpu.vector_store %arg10[%81, %c0_25], %80 {strides = array<i32>} : memref<64x32xf32, #tpu.memory_space<vmem>>, vector<8x32xf32>,
    %c2_i32 = arith.constant 2 : i32
    %c8_i32_26 = arith.constant 8 : i32
    %83 = arith.muli %c2_i32, %c8_i32_26 : i32
    %84 = tpu.assume_multiple %83, 8 : i32
    %c7_i32_27 = arith.constant 7 : i32
    %85 = arith.subi %c7_i32_27, %c2_i32 : i32
    %c8_i32_28 = arith.constant 8 : i32
    %86 = arith.muli %85, %c8_i32_28 : i32
    %87 = tpu.assume_multiple %86, 8 : i32
    %88 = arith.index_cast %84 : i32 to index
    %c0_29 = arith.constant 0 : index
    %89 = vector.load %arg8[%88, %c0_29] : memref<64x256xf32, #tpu.memory_space<vmem>>, vector<8x256xf32>
    %90 = arith.truncf %76 : vector<8x64xf32> to vector<8x64xbf16>
    %cst_30 = arith.constant dense<0.000000e+00> : vector<8x256xf32>
    %91 = tpu.matmul %90, %7, %cst_30 {dimension_numbers = #tpu.dot_dimension_numbers<[1], [0], [0], [1], [0, 0, 1, 1], [], []>} : vector<8x64xbf16>, vector<64x256xbf16>, vector<8x256xf32> -> vector<8x256xf32>
    %92 = arith.addf %89, %91 : vector<8x256xf32>
    %93 = vector.extract_strided_slice %92 {offsets = [0, 0], sizes = [8, 128], strides = [1, 1]} : vector<8x256xf32> to vector<8x128xf32>
    %94 = arith.negf %93 : vector<8x128xf32>
    %95 = math.exp %94 : vector<8x128xf32>
    %cst_31 = arith.constant 1.000000e+00 : f32
    %96 = vector.broadcast %cst_31 : f32 to vector<8x128xf32>
    %97 = arith.addf %96, %95 : vector<8x128xf32>
    %98 = arith.divf %96, %97 : vector<8x128xf32>
    %99 = vector.extract_strided_slice %92 {offsets = [0, 128], sizes = [8, 64], strides = [1, 1]} : vector<8x256xf32> to vector<8x64xf32>
    %100 = math.tanh %99 : vector<8x64xf32>
    %101 = vector.extract_strided_slice %92 {offsets = [0, 192], sizes = [8, 64], strides = [1, 1]} : vector<8x256xf32> to vector<8x64xf32>
    %102 = arith.negf %101 : vector<8x64xf32>
    %103 = math.exp %102 : vector<8x64xf32>
    %cst_32 = arith.constant 1.000000e+00 : f32
    %104 = vector.broadcast %cst_32 : f32 to vector<8x64xf32>
    %105 = arith.addf %104, %103 : vector<8x64xf32>
    %106 = arith.divf %104, %105 : vector<8x64xf32>
    %107 = vector.extract_strided_slice %98 {offsets = [0, 0], sizes = [8, 64], strides = [1, 1]} : vector<8x128xf32> to vector<8x64xf32>
    %108 = vector.extract_strided_slice %98 {offsets = [0, 64], sizes = [8, 64], strides = [1, 1]} : vector<8x128xf32> to vector<8x64xf32>
    %109 = arith.mulf %108, %74 : vector<8x64xf32>
    %110 = arith.mulf %107, %100 : vector<8x64xf32>
    %111 = arith.addf %109, %110 : vector<8x64xf32>
    %112 = math.tanh %111 : vector<8x64xf32>
    %113 = arith.mulf %106, %112 : vector<8x64xf32>
    %114 = vector.extract_strided_slice %113 {offsets = [0, 0], sizes = [8, 32], strides = [1, 1]} : vector<8x64xf32> to vector<8x32xf32>
    %115 = arith.index_cast %84 : i32 to index
    %c0_33 = arith.constant 0 : index
    %116 = vector.load %arg9[%115, %c0_33] : memref<64x32xf32, #tpu.memory_space<vmem>>, vector<8x32xf32>
    tpu.vector_store %arg9[%115, %c0_33], %114 {strides = array<i32>} : memref<64x32xf32, #tpu.memory_space<vmem>>, vector<8x32xf32>,
    %117 = vector.extract_strided_slice %113 {offsets = [0, 32], sizes = [8, 32], strides = [1, 1]} : vector<8x64xf32> to vector<8x32xf32>
    %118 = arith.index_cast %87 : i32 to index
    %c0_34 = arith.constant 0 : index
    %119 = vector.load %arg10[%118, %c0_34] : memref<64x32xf32, #tpu.memory_space<vmem>>, vector<8x32xf32>
    tpu.vector_store %arg10[%118, %c0_34], %117 {strides = array<i32>} : memref<64x32xf32, #tpu.memory_space<vmem>>, vector<8x32xf32>,
    %c3_i32 = arith.constant 3 : i32
    %c8_i32_35 = arith.constant 8 : i32
    %120 = arith.muli %c3_i32, %c8_i32_35 : i32
    %121 = tpu.assume_multiple %120, 8 : i32
    %c7_i32_36 = arith.constant 7 : i32
    %122 = arith.subi %c7_i32_36, %c3_i32 : i32
    %c8_i32_37 = arith.constant 8 : i32
    %123 = arith.muli %122, %c8_i32_37 : i32
    %124 = tpu.assume_multiple %123, 8 : i32
    %125 = arith.index_cast %121 : i32 to index
    %c0_38 = arith.constant 0 : index
    %126 = vector.load %arg8[%125, %c0_38] : memref<64x256xf32, #tpu.memory_space<vmem>>, vector<8x256xf32>
    %127 = arith.truncf %113 : vector<8x64xf32> to vector<8x64xbf16>
    %cst_39 = arith.constant dense<0.000000e+00> : vector<8x256xf32>
    %128 = tpu.matmul %127, %7, %cst_39 {dimension_numbers = #tpu.dot_dimension_numbers<[1], [0], [0], [1], [0, 0, 1, 1], [], []>} : vector<8x64xbf16>, vector<64x256xbf16>, vector<8x256xf32> -> vector<8x256xf32>
    %129 = arith.addf %126, %128 : vector<8x256xf32>
    %130 = vector.extract_strided_slice %129 {offsets = [0, 0], sizes = [8, 128], strides = [1, 1]} : vector<8x256xf32> to vector<8x128xf32>
    %131 = arith.negf %130 : vector<8x128xf32>
    %132 = math.exp %131 : vector<8x128xf32>
    %cst_40 = arith.constant 1.000000e+00 : f32
    %133 = vector.broadcast %cst_40 : f32 to vector<8x128xf32>
    %134 = arith.addf %133, %132 : vector<8x128xf32>
    %135 = arith.divf %133, %134 : vector<8x128xf32>
    %136 = vector.extract_strided_slice %129 {offsets = [0, 128], sizes = [8, 64], strides = [1, 1]} : vector<8x256xf32> to vector<8x64xf32>
    %137 = math.tanh %136 : vector<8x64xf32>
    %138 = vector.extract_strided_slice %129 {offsets = [0, 192], sizes = [8, 64], strides = [1, 1]} : vector<8x256xf32> to vector<8x64xf32>
    %139 = arith.negf %138 : vector<8x64xf32>
    %140 = math.exp %139 : vector<8x64xf32>
    %cst_41 = arith.constant 1.000000e+00 : f32
    %141 = vector.broadcast %cst_41 : f32 to vector<8x64xf32>
    %142 = arith.addf %141, %140 : vector<8x64xf32>
    %143 = arith.divf %141, %142 : vector<8x64xf32>
    %144 = vector.extract_strided_slice %135 {offsets = [0, 0], sizes = [8, 64], strides = [1, 1]} : vector<8x128xf32> to vector<8x64xf32>
    %145 = vector.extract_strided_slice %135 {offsets = [0, 64], sizes = [8, 64], strides = [1, 1]} : vector<8x128xf32> to vector<8x64xf32>
    %146 = arith.mulf %145, %111 : vector<8x64xf32>
    %147 = arith.mulf %144, %137 : vector<8x64xf32>
    %148 = arith.addf %146, %147 : vector<8x64xf32>
    %149 = math.tanh %148 : vector<8x64xf32>
    %150 = arith.mulf %143, %149 : vector<8x64xf32>
    %151 = vector.extract_strided_slice %150 {offsets = [0, 0], sizes = [8, 32], strides = [1, 1]} : vector<8x64xf32> to vector<8x32xf32>
    %152 = arith.index_cast %121 : i32 to index
    %c0_42 = arith.constant 0 : index
    %153 = vector.load %arg9[%152, %c0_42] : memref<64x32xf32, #tpu.memory_space<vmem>>, vector<8x32xf32>
    tpu.vector_store %arg9[%152, %c0_42], %151 {strides = array<i32>} : memref<64x32xf32, #tpu.memory_space<vmem>>, vector<8x32xf32>,
    %154 = vector.extract_strided_slice %150 {offsets = [0, 32], sizes = [8, 32], strides = [1, 1]} : vector<8x64xf32> to vector<8x32xf32>
    %155 = arith.index_cast %124 : i32 to index
    %c0_43 = arith.constant 0 : index
    %156 = vector.load %arg10[%155, %c0_43] : memref<64x32xf32, #tpu.memory_space<vmem>>, vector<8x32xf32>
    tpu.vector_store %arg10[%155, %c0_43], %154 {strides = array<i32>} : memref<64x32xf32, #tpu.memory_space<vmem>>, vector<8x32xf32>,
    %c4_i32 = arith.constant 4 : i32
    %c8_i32_44 = arith.constant 8 : i32
    %157 = arith.muli %c4_i32, %c8_i32_44 : i32
    %158 = tpu.assume_multiple %157, 8 : i32
    %c7_i32_45 = arith.constant 7 : i32
    %159 = arith.subi %c7_i32_45, %c4_i32 : i32
    %c8_i32_46 = arith.constant 8 : i32
    %160 = arith.muli %159, %c8_i32_46 : i32
    %161 = tpu.assume_multiple %160, 8 : i32
    %162 = arith.index_cast %158 : i32 to index
    %c0_47 = arith.constant 0 : index
    %163 = vector.load %arg8[%162, %c0_47] : memref<64x256xf32, #tpu.memory_space<vmem>>, vector<8x256xf32>
    %164 = arith.truncf %150 : vector<8x64xf32> to vector<8x64xbf16>
    %cst_48 = arith.constant dense<0.000000e+00> : vector<8x256xf32>
    %165 = tpu.matmul %164, %7, %cst_48 {dimension_numbers = #tpu.dot_dimension_numbers<[1], [0], [0], [1], [0, 0, 1, 1], [], []>} : vector<8x64xbf16>, vector<64x256xbf16>, vector<8x256xf32> -> vector<8x256xf32>
    %166 = arith.addf %163, %165 : vector<8x256xf32>
    %167 = vector.extract_strided_slice %166 {offsets = [0, 0], sizes = [8, 128], strides = [1, 1]} : vector<8x256xf32> to vector<8x128xf32>
    %168 = arith.negf %167 : vector<8x128xf32>
    %169 = math.exp %168 : vector<8x128xf32>
    %cst_49 = arith.constant 1.000000e+00 : f32
    %170 = vector.broadcast %cst_49 : f32 to vector<8x128xf32>
    %171 = arith.addf %170, %169 : vector<8x128xf32>
    %172 = arith.divf %170, %171 : vector<8x128xf32>
    %173 = vector.extract_strided_slice %166 {offsets = [0, 128], sizes = [8, 64], strides = [1, 1]} : vector<8x256xf32> to vector<8x64xf32>
    %174 = math.tanh %173 : vector<8x64xf32>
    %175 = vector.extract_strided_slice %166 {offsets = [0, 192], sizes = [8, 64], strides = [1, 1]} : vector<8x256xf32> to vector<8x64xf32>
    %176 = arith.negf %175 : vector<8x64xf32>
    %177 = math.exp %176 : vector<8x64xf32>
    %cst_50 = arith.constant 1.000000e+00 : f32
    %178 = vector.broadcast %cst_50 : f32 to vector<8x64xf32>
    %179 = arith.addf %178, %177 : vector<8x64xf32>
    %180 = arith.divf %178, %179 : vector<8x64xf32>
    %181 = vector.extract_strided_slice %172 {offsets = [0, 0], sizes = [8, 64], strides = [1, 1]} : vector<8x128xf32> to vector<8x64xf32>
    %182 = vector.extract_strided_slice %172 {offsets = [0, 64], sizes = [8, 64], strides = [1, 1]} : vector<8x128xf32> to vector<8x64xf32>
    %183 = arith.mulf %182, %148 : vector<8x64xf32>
    %184 = arith.mulf %181, %174 : vector<8x64xf32>
    %185 = arith.addf %183, %184 : vector<8x64xf32>
    %186 = math.tanh %185 : vector<8x64xf32>
    %187 = arith.mulf %180, %186 : vector<8x64xf32>
    %188 = vector.extract_strided_slice %187 {offsets = [0, 0], sizes = [8, 32], strides = [1, 1]} : vector<8x64xf32> to vector<8x32xf32>
    %189 = arith.index_cast %158 : i32 to index
    %c0_51 = arith.constant 0 : index
    %190 = vector.load %arg9[%189, %c0_51] : memref<64x32xf32, #tpu.memory_space<vmem>>, vector<8x32xf32>
    tpu.vector_store %arg9[%189, %c0_51], %188 {strides = array<i32>} : memref<64x32xf32, #tpu.memory_space<vmem>>, vector<8x32xf32>,
    %191 = vector.extract_strided_slice %187 {offsets = [0, 32], sizes = [8, 32], strides = [1, 1]} : vector<8x64xf32> to vector<8x32xf32>
    %192 = arith.index_cast %161 : i32 to index
    %c0_52 = arith.constant 0 : index
    %193 = vector.load %arg10[%192, %c0_52] : memref<64x32xf32, #tpu.memory_space<vmem>>, vector<8x32xf32>
    tpu.vector_store %arg10[%192, %c0_52], %191 {strides = array<i32>} : memref<64x32xf32, #tpu.memory_space<vmem>>, vector<8x32xf32>,
    %c5_i32 = arith.constant 5 : i32
    %c8_i32_53 = arith.constant 8 : i32
    %194 = arith.muli %c5_i32, %c8_i32_53 : i32
    %195 = tpu.assume_multiple %194, 8 : i32
    %c7_i32_54 = arith.constant 7 : i32
    %196 = arith.subi %c7_i32_54, %c5_i32 : i32
    %c8_i32_55 = arith.constant 8 : i32
    %197 = arith.muli %196, %c8_i32_55 : i32
    %198 = tpu.assume_multiple %197, 8 : i32
    %199 = arith.index_cast %195 : i32 to index
    %c0_56 = arith.constant 0 : index
    %200 = vector.load %arg8[%199, %c0_56] : memref<64x256xf32, #tpu.memory_space<vmem>>, vector<8x256xf32>
    %201 = arith.truncf %187 : vector<8x64xf32> to vector<8x64xbf16>
    %cst_57 = arith.constant dense<0.000000e+00> : vector<8x256xf32>
    %202 = tpu.matmul %201, %7, %cst_57 {dimension_numbers = #tpu.dot_dimension_numbers<[1], [0], [0], [1], [0, 0, 1, 1], [], []>} : vector<8x64xbf16>, vector<64x256xbf16>, vector<8x256xf32> -> vector<8x256xf32>
    %203 = arith.addf %200, %202 : vector<8x256xf32>
    %204 = vector.extract_strided_slice %203 {offsets = [0, 0], sizes = [8, 128], strides = [1, 1]} : vector<8x256xf32> to vector<8x128xf32>
    %205 = arith.negf %204 : vector<8x128xf32>
    %206 = math.exp %205 : vector<8x128xf32>
    %cst_58 = arith.constant 1.000000e+00 : f32
    %207 = vector.broadcast %cst_58 : f32 to vector<8x128xf32>
    %208 = arith.addf %207, %206 : vector<8x128xf32>
    %209 = arith.divf %207, %208 : vector<8x128xf32>
    %210 = vector.extract_strided_slice %203 {offsets = [0, 128], sizes = [8, 64], strides = [1, 1]} : vector<8x256xf32> to vector<8x64xf32>
    %211 = math.tanh %210 : vector<8x64xf32>
    %212 = vector.extract_strided_slice %203 {offsets = [0, 192], sizes = [8, 64], strides = [1, 1]} : vector<8x256xf32> to vector<8x64xf32>
    %213 = arith.negf %212 : vector<8x64xf32>
    %214 = math.exp %213 : vector<8x64xf32>
    %cst_59 = arith.constant 1.000000e+00 : f32
    %215 = vector.broadcast %cst_59 : f32 to vector<8x64xf32>
    %216 = arith.addf %215, %214 : vector<8x64xf32>
    %217 = arith.divf %215, %216 : vector<8x64xf32>
    %218 = vector.extract_strided_slice %209 {offsets = [0, 0], sizes = [8, 64], strides = [1, 1]} : vector<8x128xf32> to vector<8x64xf32>
    %219 = vector.extract_strided_slice %209 {offsets = [0, 64], sizes = [8, 64], strides = [1, 1]} : vector<8x128xf32> to vector<8x64xf32>
    %220 = arith.mulf %219, %185 : vector<8x64xf32>
    %221 = arith.mulf %218, %211 : vector<8x64xf32>
    %222 = arith.addf %220, %221 : vector<8x64xf32>
    %223 = math.tanh %222 : vector<8x64xf32>
    %224 = arith.mulf %217, %223 : vector<8x64xf32>
    %225 = vector.extract_strided_slice %224 {offsets = [0, 0], sizes = [8, 32], strides = [1, 1]} : vector<8x64xf32> to vector<8x32xf32>
    %226 = arith.index_cast %195 : i32 to index
    %c0_60 = arith.constant 0 : index
    %227 = vector.load %arg9[%226, %c0_60] : memref<64x32xf32, #tpu.memory_space<vmem>>, vector<8x32xf32>
    tpu.vector_store %arg9[%226, %c0_60], %225 {strides = array<i32>} : memref<64x32xf32, #tpu.memory_space<vmem>>, vector<8x32xf32>,
    %228 = vector.extract_strided_slice %224 {offsets = [0, 32], sizes = [8, 32], strides = [1, 1]} : vector<8x64xf32> to vector<8x32xf32>
    %229 = arith.index_cast %198 : i32 to index
    %c0_61 = arith.constant 0 : index
    %230 = vector.load %arg10[%229, %c0_61] : memref<64x32xf32, #tpu.memory_space<vmem>>, vector<8x32xf32>
    tpu.vector_store %arg10[%229, %c0_61], %228 {strides = array<i32>} : memref<64x32xf32, #tpu.memory_space<vmem>>, vector<8x32xf32>,
    %c6_i32 = arith.constant 6 : i32
    %c8_i32_62 = arith.constant 8 : i32
    %231 = arith.muli %c6_i32, %c8_i32_62 : i32
    %232 = tpu.assume_multiple %231, 8 : i32
    %c7_i32_63 = arith.constant 7 : i32
    %233 = arith.subi %c7_i32_63, %c6_i32 : i32
    %c8_i32_64 = arith.constant 8 : i32
    %234 = arith.muli %233, %c8_i32_64 : i32
    %235 = tpu.assume_multiple %234, 8 : i32
    %236 = arith.index_cast %232 : i32 to index
    %c0_65 = arith.constant 0 : index
    %237 = vector.load %arg8[%236, %c0_65] : memref<64x256xf32, #tpu.memory_space<vmem>>, vector<8x256xf32>
    %238 = arith.truncf %224 : vector<8x64xf32> to vector<8x64xbf16>
    %cst_66 = arith.constant dense<0.000000e+00> : vector<8x256xf32>
    %239 = tpu.matmul %238, %7, %cst_66 {dimension_numbers = #tpu.dot_dimension_numbers<[1], [0], [0], [1], [0, 0, 1, 1], [], []>} : vector<8x64xbf16>, vector<64x256xbf16>, vector<8x256xf32> -> vector<8x256xf32>
    %240 = arith.addf %237, %239 : vector<8x256xf32>
    %241 = vector.extract_strided_slice %240 {offsets = [0, 0], sizes = [8, 128], strides = [1, 1]} : vector<8x256xf32> to vector<8x128xf32>
    %242 = arith.negf %241 : vector<8x128xf32>
    %243 = math.exp %242 : vector<8x128xf32>
    %cst_67 = arith.constant 1.000000e+00 : f32
    %244 = vector.broadcast %cst_67 : f32 to vector<8x128xf32>
    %245 = arith.addf %244, %243 : vector<8x128xf32>
    %246 = arith.divf %244, %245 : vector<8x128xf32>
    %247 = vector.extract_strided_slice %240 {offsets = [0, 128], sizes = [8, 64], strides = [1, 1]} : vector<8x256xf32> to vector<8x64xf32>
    %248 = math.tanh %247 : vector<8x64xf32>
    %249 = vector.extract_strided_slice %240 {offsets = [0, 192], sizes = [8, 64], strides = [1, 1]} : vector<8x256xf32> to vector<8x64xf32>
    %250 = arith.negf %249 : vector<8x64xf32>
    %251 = math.exp %250 : vector<8x64xf32>
    %cst_68 = arith.constant 1.000000e+00 : f32
    %252 = vector.broadcast %cst_68 : f32 to vector<8x64xf32>
    %253 = arith.addf %252, %251 : vector<8x64xf32>
    %254 = arith.divf %252, %253 : vector<8x64xf32>
    %255 = vector.extract_strided_slice %246 {offsets = [0, 0], sizes = [8, 64], strides = [1, 1]} : vector<8x128xf32> to vector<8x64xf32>
    %256 = vector.extract_strided_slice %246 {offsets = [0, 64], sizes = [8, 64], strides = [1, 1]} : vector<8x128xf32> to vector<8x64xf32>
    %257 = arith.mulf %256, %222 : vector<8x64xf32>
    %258 = arith.mulf %255, %248 : vector<8x64xf32>
    %259 = arith.addf %257, %258 : vector<8x64xf32>
    %260 = math.tanh %259 : vector<8x64xf32>
    %261 = arith.mulf %254, %260 : vector<8x64xf32>
    %262 = vector.extract_strided_slice %261 {offsets = [0, 0], sizes = [8, 32], strides = [1, 1]} : vector<8x64xf32> to vector<8x32xf32>
    %263 = arith.index_cast %232 : i32 to index
    %c0_69 = arith.constant 0 : index
    %264 = vector.load %arg9[%263, %c0_69] : memref<64x32xf32, #tpu.memory_space<vmem>>, vector<8x32xf32>
    tpu.vector_store %arg9[%263, %c0_69], %262 {strides = array<i32>} : memref<64x32xf32, #tpu.memory_space<vmem>>, vector<8x32xf32>,
    %265 = vector.extract_strided_slice %261 {offsets = [0, 32], sizes = [8, 32], strides = [1, 1]} : vector<8x64xf32> to vector<8x32xf32>
    %266 = arith.index_cast %235 : i32 to index
    %c0_70 = arith.constant 0 : index
    %267 = vector.load %arg10[%266, %c0_70] : memref<64x32xf32, #tpu.memory_space<vmem>>, vector<8x32xf32>
    tpu.vector_store %arg10[%266, %c0_70], %265 {strides = array<i32>} : memref<64x32xf32, #tpu.memory_space<vmem>>, vector<8x32xf32>,
    %c7_i32_71 = arith.constant 7 : i32
    %c8_i32_72 = arith.constant 8 : i32
    %268 = arith.muli %c7_i32_71, %c8_i32_72 : i32
    %269 = tpu.assume_multiple %268, 8 : i32
    %c7_i32_73 = arith.constant 7 : i32
    %270 = arith.subi %c7_i32_73, %c7_i32_71 : i32
    %c8_i32_74 = arith.constant 8 : i32
    %271 = arith.muli %270, %c8_i32_74 : i32
    %272 = tpu.assume_multiple %271, 8 : i32
    %273 = arith.index_cast %269 : i32 to index
    %c0_75 = arith.constant 0 : index
    %274 = vector.load %arg8[%273, %c0_75] : memref<64x256xf32, #tpu.memory_space<vmem>>, vector<8x256xf32>
    %275 = arith.truncf %261 : vector<8x64xf32> to vector<8x64xbf16>
    %cst_76 = arith.constant dense<0.000000e+00> : vector<8x256xf32>
    %276 = tpu.matmul %275, %7, %cst_76 {dimension_numbers = #tpu.dot_dimension_numbers<[1], [0], [0], [1], [0, 0, 1, 1], [], []>} : vector<8x64xbf16>, vector<64x256xbf16>, vector<8x256xf32> -> vector<8x256xf32>
    %277 = arith.addf %274, %276 : vector<8x256xf32>
    %278 = vector.extract_strided_slice %277 {offsets = [0, 0], sizes = [8, 128], strides = [1, 1]} : vector<8x256xf32> to vector<8x128xf32>
    %279 = arith.negf %278 : vector<8x128xf32>
    %280 = math.exp %279 : vector<8x128xf32>
    %cst_77 = arith.constant 1.000000e+00 : f32
    %281 = vector.broadcast %cst_77 : f32 to vector<8x128xf32>
    %282 = arith.addf %281, %280 : vector<8x128xf32>
    %283 = arith.divf %281, %282 : vector<8x128xf32>
    %284 = vector.extract_strided_slice %277 {offsets = [0, 128], sizes = [8, 64], strides = [1, 1]} : vector<8x256xf32> to vector<8x64xf32>
    %285 = math.tanh %284 : vector<8x64xf32>
    %286 = vector.extract_strided_slice %277 {offsets = [0, 192], sizes = [8, 64], strides = [1, 1]} : vector<8x256xf32> to vector<8x64xf32>
    %287 = arith.negf %286 : vector<8x64xf32>
    %288 = math.exp %287 : vector<8x64xf32>
    %cst_78 = arith.constant 1.000000e+00 : f32
    %289 = vector.broadcast %cst_78 : f32 to vector<8x64xf32>
    %290 = arith.addf %289, %288 : vector<8x64xf32>
    %291 = arith.divf %289, %290 : vector<8x64xf32>
    %292 = vector.extract_strided_slice %283 {offsets = [0, 0], sizes = [8, 64], strides = [1, 1]} : vector<8x128xf32> to vector<8x64xf32>
    %293 = vector.extract_strided_slice %283 {offsets = [0, 64], sizes = [8, 64], strides = [1, 1]} : vector<8x128xf32> to vector<8x64xf32>
    %294 = arith.mulf %293, %259 : vector<8x64xf32>
    %295 = arith.mulf %292, %285 : vector<8x64xf32>
    %296 = arith.addf %294, %295 : vector<8x64xf32>
    %297 = math.tanh %296 : vector<8x64xf32>
    %298 = arith.mulf %291, %297 : vector<8x64xf32>
    %299 = vector.extract_strided_slice %298 {offsets = [0, 0], sizes = [8, 32], strides = [1, 1]} : vector<8x64xf32> to vector<8x32xf32>
    %300 = arith.index_cast %269 : i32 to index
    %c0_79 = arith.constant 0 : index
    %301 = vector.load %arg9[%300, %c0_79] : memref<64x32xf32, #tpu.memory_space<vmem>>, vector<8x32xf32>
    tpu.vector_store %arg9[%300, %c0_79], %299 {strides = array<i32>} : memref<64x32xf32, #tpu.memory_space<vmem>>, vector<8x32xf32>,
    %302 = vector.extract_strided_slice %298 {offsets = [0, 32], sizes = [8, 32], strides = [1, 1]} : vector<8x64xf32> to vector<8x32xf32>
    %303 = arith.index_cast %272 : i32 to index
    %c0_80 = arith.constant 0 : index
    %304 = vector.load %arg10[%303, %c0_80] : memref<64x32xf32, #tpu.memory_space<vmem>>, vector<8x32xf32>
    tpu.vector_store %arg10[%303, %c0_80], %302 {strides = array<i32>} : memref<64x32xf32, #tpu.memory_space<vmem>>, vector<8x32xf32>,
    %c8_i32_81 = arith.constant 8 : i32
    %c0_82 = arith.constant 0 : index
    %c0_83 = arith.constant 0 : index
    %305 = vector.load %arg9[%c0_82, %c0_83] : memref<64x32xf32, #tpu.memory_space<vmem>>, vector<64x32xf32>
    %306 = arith.truncf %305 : vector<64x32xf32> to vector<64x32xbf16>
    %c0_84 = arith.constant 0 : index
    %c0_85 = arith.constant 0 : index
    %307 = vector.load %arg4[%c0_84, %c0_85] : memref<32x128xbf16, #tpu.memory_space<vmem>>, vector<32x128xbf16>
    %cst_86 = arith.constant dense<0.000000e+00> : vector<64x128xf32>
    %308 = tpu.matmul %306, %307, %cst_86 {dimension_numbers = #tpu.dot_dimension_numbers<[1], [0], [0], [1], [0, 0, 1, 1], [], []>} : vector<64x32xbf16>, vector<32x128xbf16>, vector<64x128xf32> -> vector<64x128xf32>
    %c0_87 = arith.constant 0 : index
    %c0_88 = arith.constant 0 : index
    %309 = vector.load %arg10[%c0_87, %c0_88] : memref<64x32xf32, #tpu.memory_space<vmem>>, vector<64x32xf32>
    %310 = arith.truncf %309 : vector<64x32xf32> to vector<64x32xbf16>
    %c0_89 = arith.constant 0 : index
    %c0_90 = arith.constant 0 : index
    %311 = vector.load %arg5[%c0_89, %c0_90] : memref<32x128xbf16, #tpu.memory_space<vmem>>, vector<32x128xbf16>
    %cst_91 = arith.constant dense<0.000000e+00> : vector<64x128xf32>
    %312 = tpu.matmul %310, %311, %cst_91 {dimension_numbers = #tpu.dot_dimension_numbers<[1], [0], [0], [1], [0, 0, 1, 1], [], []>} : vector<64x32xbf16>, vector<32x128xbf16>, vector<64x128xf32> -> vector<64x128xf32>
    %313 = arith.addf %308, %312 : vector<64x128xf32>
    %c0_92 = arith.constant 0 : index
    %c0_93 = arith.constant 0 : index
    %314 = vector.load %arg6[%c0_92, %c0_93] : memref<1x128xf32, #tpu.memory_space<vmem>>, vector<1x128xf32>
    %315 = vector.broadcast %314 : vector<1x128xf32> to vector<64x128xf32>
    %316 = arith.addf %313, %315 : vector<64x128xf32>
    %c0_94 = arith.constant 0 : index
    %c0_95 = arith.constant 0 : index
    %317 = vector.load %arg7[%c0_94, %c0_95] : memref<64x128xf32, #tpu.memory_space<vmem>>, vector<64x128xf32>
    tpu.vector_store %arg7[%c0_94, %c0_95], %316 {strides = array<i32>} : memref<64x128xf32, #tpu.memory_space<vmem>>, vector<64x128xf32>,
    return
  }
}

</mosaic_0001>

<llo_original>
// kernel: tpu_custom_call.1
$region0: #{tpu_custom_call.1}
  #allocation0 [shape = 'u32[]', space=smem, size = 0x4, offset = 0x4, fixed_abs, tag = 'smem constant byte address 0x4 - core index']
  #allocation1 [shape = 'u32[144,128]{1,0:T(1,128)}', space=vmem, size = 0x12000, scoped, tag = 'internal scratch']
  #allocation2 [shape = 'f32[64,256]{1,0:T(8,128)}', space=vmem, size = 0x10000, scoped, tag = 'scratch operand']
  #allocation3 [shape = 'f32[64,32]{1,0:T(8,128)}', space=vmem, size = 0x8000, scoped, tag = 'scratch operand']
  #allocation4 [shape = 'f32[64,32]{1,0:T(8,128)}', space=vmem, size = 0x8000, scoped, tag = 'scratch operand']
  %s0 = inlined_call_operand.vmem [shape: bf16[64,32], index: 0, kind: input, shape index: {}]
  %s1 = inlined_call_operand.vmem [shape: bf16[32,256], index: 1, kind: input, shape index: {}]
  %s2 = inlined_call_operand.vmem [shape: f32[1,256], index: 2, kind: input, shape index: {}]
  %s3 = inlined_call_operand.hbm [shape: bf16[64,256], index: 3, kind: input, shape index: {}]
  %s4 = inlined_call_operand.vmem [shape: bf16[32,128], index: 4, kind: input, shape index: {}]
  %s5 = inlined_call_operand.vmem [shape: bf16[32,128], index: 5, kind: input, shape index: {}]
  %s6 = inlined_call_operand.vmem [shape: f32[1,128], index: 6, kind: input, shape index: {}]
  %s7 = inlined_call_operand.hbm [shape: f32[64,128], index: 7, kind: output, shape index: {}]
  %s8 = sld [smem:[#allocation0]]
  $region42: #{tpu_custom_call.1} parent=0
    _
  %s10 = ssub.s32 1, %s8
  %s11 = scalar_select 0, %s10, %s8
  $region1: #{tpu_custom_call.1} parent=0
    #allocation5 [shape = 'u8[32768]{0}', space=vmem, size = 0x8000, scoped, tag = 'input window, operand 3, single buffered']
    #allocation6 [shape = 's32[1]{0}', space=sflag, size = 0x4, scoped, tag = 'scoped memory for tpu_custom_call.1']
    #allocation7 [shape = 's32[1]{0}', space=sflag, size = 0x4, scoped, tag = 'scoped memory for tpu_custom_call.1']
    #allocation8 [shape = 'u8[32768]{0}', space=vmem, size = 0x8000, scoped, tag = 'output window, operand 0, single buffered']
    %12 = vsyncpa [#allocation6], 0
    %13 = vsyncpa [#allocation7], 0
    // Predicated region
    $region2: #{tpu_custom_call.1} parent=1 // pred_check
      _
    $region3: #{tpu_custom_call.1} parent=1 // pred_check_branch
      %15 = sbr.rel (0) target = $region5
    $region4: #{tpu_custom_call.1} parent=1 // pred_region
      _
    $region5: #{tpu_custom_call.1} parent=1 // pred_fallthru
      _
    // Predicated region
    $region6: #{tpu_custom_call.1} parent=1 // pred_check
      _
    $region7: #{tpu_custom_call.1} parent=1 // pred_check_branch
      %17 = sbr.rel (0) target = $region9
    $region8: #{tpu_custom_call.1} parent=1 // pred_region
      _
    $region9: #{tpu_custom_call.1} parent=1 // pred_fallthru
      _
    // Predicated region
    $region10: #{tpu_custom_call.1} parent=1 // pred_check
      _
    $region11: #{tpu_custom_call.1} parent=1 // pred_check_branch
      %19 = sbr.rel (0) target = $region13
    $region12: #{tpu_custom_call.1} parent=1 // pred_region
      _
    $region13: #{tpu_custom_call.1} parent=1 // pred_fallthru
      _
    // Predicated region
    $region14: #{tpu_custom_call.1} parent=1 // pred_check
      _
    $region15: #{tpu_custom_call.1} parent=1 // pred_check_branch
      %21 = sbr.rel (0) target = $region17
    $region16: #{tpu_custom_call.1} parent=1 // pred_region
      %s23 = ssub.s32 1024, 1024
      %24 = vsyncadd [#allocation6], %s23
      %s25 = sshll.u32 [#allocation5], 4
      %s26 = int_to_ptr.vmem [resolvable:$true] %s25
      %31 = dma.hbm_to_vmem [thread:$0]  %s3, 1024, %s26, [#allocation6], 128, 128, 8
    $region17: #{tpu_custom_call.1} parent=1 // pred_fallthru
      _
    // Predicated region
    $region18: #{tpu_custom_call.1} parent=1 // pred_check
      _
    $region19: #{tpu_custom_call.1} parent=1 // pred_check_branch
      %33 = sbr.rel (0) target = $region21
    $region20: #{tpu_custom_call.1} parent=1 // pred_region
      _
    $region21: #{tpu_custom_call.1} parent=1 // pred_fallthru
      _
    // Predicated region
    $region22: #{tpu_custom_call.1} parent=1 // pred_check
      _
    $region23: #{tpu_custom_call.1} parent=1 // pred_check_branch
      %35 = sbr.rel (0) target = $region25
    $region24: #{tpu_custom_call.1} parent=1 // pred_region
      _
    $region25: #{tpu_custom_call.1} parent=1 // pred_fallthru
      _
    // Predicated region
    $region26: #{tpu_custom_call.1} parent=1 // pred_check
      _
    $region27: #{tpu_custom_call.1} parent=1 // pred_check_branch
      %37 = sbr.rel (0) target = $region29
    $region28: #{tpu_custom_call.1} parent=1 // pred_region
      _
    $region29: #{tpu_custom_call.1} parent=1 // pred_fallthru
      _
    // Predicated region
    $region30: #{tpu_custom_call.1} parent=1 // pred_check
      _
    $region31: #{tpu_custom_call.1} parent=1 // pred_check_branch
      %39 = sbr.rel (0) target = $region33
    $region32: #{tpu_custom_call.1} parent=1 // pred_region
      %40 = dma.done [#allocation6], 1024
    $region33: #{tpu_custom_call.1} parent=1 // pred_fallthru
      _
    %v42 = vld [vmem:[%s0] sm:$0xf]
    %v43 = vld [vmem:[%s0 + $0x4] sm:$0xf]
    %v44 = vld [vmem:[%s0 + $0x8] sm:$0xf]
    %v45 = vld [vmem:[%s0 + $0xc] sm:$0xf]
    %v46 = vld [vmem:[%s0 + $0x10] sm:$0xf]
    %v47 = vld [vmem:[%s0 + $0x14] sm:$0xf]
    %v48 = vld [vmem:[%s0 + $0x18] sm:$0xf]
    %v49 = vld [vmem:[%s0 + $0x1c] sm:$0xf]
    %v50 = vld [vmem:[%s1] sm:$0xff]
    %v51 = vld [vmem:[%s1 + $0x8] sm:$0xff]
    %v52 = vld [vmem:[%s1 + $0x10] sm:$0xff]
    %v53 = vld [vmem:[%s1 + $0x18] sm:$0xff]
    %v54 = vld [vmem:[%s2] sm:$0x3]
    %v56 = vlaneseq
    %v57 = vshrl.u32 %v56, 7
    %v58 = vsub.s32 0, %v57
    %v59 = vrot.slane %v54, %v58
    %v60 = vlaneseq
    %v61 = vshrl.u32 %v60, 7
    %v62 = vsub.s32 1, %v61
    %v63 = vrot.slane %v54, %v62
    %v74 = vunpack.c.l.b16 %v42
    %v75 = vunpack.c.l.b16 %v43
    %v76 = vunpack.c.l.b16 %v44
    %v77 = vunpack.c.l.b16 %v45
    %v78 = vunpack.c.l.b16 %v46
    %v79 = vunpack.c.l.b16 %v47
    %v80 = vunpack.c.l.b16 %v48
    %v81 = vunpack.c.l.b16 %v49
    %v82 = vpack.c.b16 %v75, %v74
    %v83 = vpack.c.b16 %v77, %v76
    %v84 = vpack.c.b16 %v79, %v78
    %v85 = vpack.c.b16 %v81, %v80
    %v90 = vunpack.c.l.b16 %v50
    %v91 = vunpack.c.h.b16 %v50
    %v92 = vunpack.c.l.b16 %v51
    %v93 = vunpack.c.h.b16 %v51
    %v94 = vunpack.c.l.b16 %v52
    %v95 = vunpack.c.h.b16 %v52
    %v96 = vunpack.c.l.b16 %v53
    %v97 = vunpack.c.h.b16 %v53
    %v98 = vpack.c.b16 %v92, %v90
    %v99 = vpack.c.b16 %v93, %v91
    %v100 = vpack.c.b16 %v96, %v94
    %v101 = vpack.c.b16 %v97, %v95
    %vm106 = vcmask 261120
    %v108 = vsel %vm106, %v82, 0
    %v111 = vsel %vm106, %v83, 0
    %v114 = vsel %vm106, %v84, 0
    %v117 = vsel %vm106, %v85, 0
    %119 = vmatprep.subr.bf16.mxu0 %v99
    %120 = vmatpush1.bf16.msra.mxu0 %v98
    %121 = vmatprep.subr.bf16.mxu0 %v101
    %122 = vmatpush1.bf16.msra.mxu0 %v100
    %123 = vmatprep.subr.bf16.mxu0 0
    %124 = vmatpush1.bf16.msra.mxu0 0
    %125 = vmatprep.subr.bf16.mxu0 0
    %126 = vmatpush1.bf16.msra.mxu0 0
    %127 = vmatprep.subr.bf16.mxu0 0
    %128 = vmatpush1.bf16.msra.mxu0 0
    %129 = vmatprep.subr.bf16.mxu0 0
    %130 = vmatpush1.bf16.msra.mxu0 0
    %131 = vmatprep.subr.bf16.mxu0 0
    %132 = vmatpush1.bf16.msra.mxu0 0
    %133 = vmatprep.subr.bf16.mxu0 0
    %134 = vmatpush1.bf16.msra.mxu0 0
    %135 = vmatprep.subr.bf16.mxu0 0
    %136 = vmatpush1.bf16.msra.mxu0 0
    %137 = vmatprep.subr.bf16.mxu0 0
    %138 = vmatpush1.bf16.msra.mxu0 0
    %139 = vmatprep.subr.bf16.mxu0 0
    %140 = vmatpush1.bf16.msra.mxu0 0
    %141 = vmatprep.subr.bf16.mxu0 0
    %142 = vmatpush1.bf16.msra.mxu0 0
    %143 = vmatprep.subr.bf16.mxu0 0
    %144 = vmatpush1.bf16.msra.mxu0 0
    %145 = vmatprep.subr.bf16.mxu0 0
    %146 = vmatpush1.bf16.msra.mxu0 0
    %147 = vmatprep.subr.bf16.mxu0 0
    %148 = vmatpush1.bf16.msra.mxu0 0
    %149 = vmatprep.subr.bf16.mxu0 0
    %150 = vmatpush1.bf16.msra.mxu0 0
    %151 = vmatprep.mubr.bf16.mxu0 0
    %152 = vmatmul.mubr.bf16.gmra.mrb[0].mxu0 %v108
    %v153 = vpop.f32.mrb[0].mxu0
    %v154 = vadd.f32 %v59, %v153
    %v155 = vpop.f32.mrb[0].mxu0
    %v156 = vadd.f32 %v63, %v155
    %v157 = vpop.f32.mrb[0].mxu0
    %v158 = vadd.f32 %v59, %v157
    %v159 = vpop.f32.mrb[0].mxu0
    %v160 = vadd.f32 %v63, %v159
    %161 = vmatprep.mubr.bf16.mxu0 0
    %162 = vmatmul.mubr.bf16.gmra.mrb[0].mxu0 %v111
    %v163 = vpop.f32.mrb[0].mxu0
    %v164 = vadd.f32 %v59, %v163
    %v165 = vpop.f32.mrb[0].mxu0
    %v166 = vadd.f32 %v63, %v165
    %v167 = vpop.f32.mrb[0].mxu0
    %v168 = vadd.f32 %v59, %v167
    %v169 = vpop.f32.mrb[0].mxu0
    %v170 = vadd.f32 %v63, %v169
    %171 = vmatprep.mubr.bf16.mxu0 0
    %172 = vmatmul.mubr.bf16.gmra.mrb[0].mxu0 %v114
    %v173 = vpop.f32.mrb[0].mxu0
    %v174 = vadd.f32 %v59, %v173
    %v175 = vpop.f32.mrb[0].mxu0
    %v176 = vadd.f32 %v63, %v175
    %v177 = vpop.f32.mrb[0].mxu0
    %v178 = vadd.f32 %v59, %v177
    %v179 = vpop.f32.mrb[0].mxu0
    %v180 = vadd.f32 %v63, %v179
    %181 = vmatprep.mubr.bf16.mxu0 0
    %182 = vmatmul.mubr.bf16.gmra.mrb[0].mxu0 %v117
    %v183 = vpop.f32.mrb[0].mxu0
    %v184 = vadd.f32 %v59, %v183
    %v185 = vpop.f32.mrb[0].mxu0
    %v186 = vadd.f32 %v63, %v185
    %v187 = vpop.f32.mrb[0].mxu0
    %v188 = vadd.f32 %v59, %v187
    %v189 = vpop.f32.mrb[0].mxu0
    %v190 = vadd.f32 %v63, %v189
    %191 = vdwg.mxu0
    %192 = vst [vmem:[#allocation2] sm:$0xff] %v154
    %193 = vst [vmem:[#allocation2 + $0x8] sm:$0xff] %v156
    %194 = vst [vmem:[#allocation2 + $0x10] sm:$0xff] %v158
    %195 = vst [vmem:[#allocation2 + $0x18] sm:$0xff] %v160
    %196 = vst [vmem:[#allocation2 + $0x20] sm:$0xff] %v164
    %197 = vst [vmem:[#allocation2 + $0x28] sm:$0xff] %v166
    %198 = vst [vmem:[#allocation2 + $0x30] sm:$0xff] %v168
    %199 = vst [vmem:[#allocation2 + $0x38] sm:$0xff] %v170
    %200 = vst [vmem:[#allocation2 + $0x40] sm:$0xff] %v174
    %201 = vst [vmem:[#allocation2 + $0x48] sm:$0xff] %v176
    %202 = vst [vmem:[#allocation2 + $0x50] sm:$0xff] %v178
    %203 = vst [vmem:[#allocation2 + $0x58] sm:$0xff] %v180
    %204 = vst [vmem:[#allocation2 + $0x60] sm:$0xff] %v184
    %205 = vst [vmem:[#allocation2 + $0x68] sm:$0xff] %v186
    %206 = vst [vmem:[#allocation2 + $0x70] sm:$0xff] %v188
    %207 = vst [vmem:[#allocation2 + $0x78] sm:$0xff] %v190
    %v208 = vld [vmem:[#allocation5] sm:$0xff]
    %v209 = vld [vmem:[#allocation5 + $0x8] sm:$0xff]
    %v210 = vld [vmem:[#allocation5 + $0x10] sm:$0xff]
    %v211 = vld [vmem:[#allocation5 + $0x18] sm:$0xff]
    %v212 = vld [vmem:[#allocation5 + $0x20] sm:$0xff]
    %v213 = vld [vmem:[#allocation5 + $0x28] sm:$0xff]
    %v214 = vld [vmem:[#allocation5 + $0x30] sm:$0xff]
    %v215 = vld [vmem:[#allocation5 + $0x38] sm:$0xff]
    %s216 = smul.u32 0, 2
    %s217 = smul.addr %s216, 8
    %s218 = scalar_lea.vmem [#allocation2], %s217
    %v219 = vld [vmem:[%s218] sm:$0xff]
    %v220 = vld [vmem:[%s218 + $0x8] sm:$0xff]
    %v229 = vunpack.c.l.b16 %v208
    %v230 = vunpack.c.h.b16 %v208
    %v231 = vunpack.c.l.b16 %v209
    %v232 = vunpack.c.h.b16 %v209
    %v233 = vunpack.c.l.b16 %v210
    %v234 = vunpack.c.h.b16 %v210
    %v235 = vunpack.c.l.b16 %v211
    %v236 = vunpack.c.h.b16 %v211
    %v237 = vunpack.c.l.b16 %v212
    %v238 = vunpack.c.h.b16 %v212
    %v239 = vunpack.c.l.b16 %v213
    %v240 = vunpack.c.h.b16 %v213
    %v241 = vunpack.c.l.b16 %v214
    %v242 = vunpack.c.h.b16 %v214
    %v243 = vunpack.c.l.b16 %v215
    %v244 = vunpack.c.h.b16 %v215
    %v245 = vpack.c.b16 %v231, %v229
    %v246 = vpack.c.b16 %v232, %v230
    %v247 = vpack.c.b16 %v235, %v233
    %v248 = vpack.c.b16 %v236, %v234
    %v249 = vpack.c.b16 %v239, %v237
    %v250 = vpack.c.b16 %v240, %v238
    %v251 = vpack.c.b16 %v243, %v241
    %v252 = vpack.c.b16 %v244, %v242
    %vm261 = vcmask 523264
    %v263 = vsel %vm261, 0, 0
    %265 = vmatprep.subr.bf16.mxu0 %v246
    %266 = vmatpush1.bf16.msra.mxu0 %v245
    %267 = vmatprep.subr.bf16.mxu0 %v248
    %268 = vmatpush1.bf16.msra.mxu0 %v247
    %269 = vmatprep.subr.bf16.mxu0 %v250
    %270 = vmatpush1.bf16.msra.mxu0 %v249
    %271 = vmatprep.subr.bf16.mxu0 %v252
    %272 = vmatpush1.bf16.msra.mxu0 %v251
    %273 = vmatprep.subr.bf16.mxu0 0
    %274 = vmatpush1.bf16.msra.mxu0 0
    %275 = vmatprep.subr.bf16.mxu0 0
    %276 = vmatpush1.bf16.msra.mxu0 0
    %277 = vmatprep.subr.bf16.mxu0 0
    %278 = vmatpush1.bf16.msra.mxu0 0
    %279 = vmatprep.subr.bf16.mxu0 0
    %280 = vmatpush1.bf16.msra.mxu0 0
    %281 = vmatprep.subr.bf16.mxu0 0
    %282 = vmatpush1.bf16.msra.mxu0 0
    %283 = vmatprep.subr.bf16.mxu0 0
    %284 = vmatpush1.bf16.msra.mxu0 0
    %285 = vmatprep.subr.bf16.mxu0 0
    %286 = vmatpush1.bf16.msra.mxu0 0
    %287 = vmatprep.subr.bf16.mxu0 0
    %288 = vmatpush1.bf16.msra.mxu0 0
    %289 = vmatprep.subr.bf16.mxu0 0
    %290 = vmatpush1.bf16.msra.mxu0 0
    %291 = vmatprep.subr.bf16.mxu0 0
    %292 = vmatpush1.bf16.msra.mxu0 0
    %293 = vmatprep.subr.bf16.mxu0 0
    %294 = vmatpush1.bf16.msra.mxu0 0
    %295 = vmatprep.subr.bf16.mxu0 0
    %296 = vmatpush1.bf16.msra.mxu0 0
    %297 = vmatprep.mubr.bf16.mxu0 0
    %298 = vmatmul.mubr.bf16.gmra.mrb[0].mxu0 %v263
    %v299 = vpop.f32.mrb[0].mxu0
    %v300 = vadd.f32 0.0, %v299
    %v301 = vpop.f32.mrb[0].mxu0
    %v302 = vadd.f32 0.0, %v301
    %v303 = vpop.f32.mrb[0].mxu0
    %v304 = vpop.f32.mrb[0].mxu0
    %305 = vdwg.mxu0
    %v306 = vadd.f32 %v219, %v300
    %v307 = vadd.f32 %v220, %v302
    %v308 = vxor.u32 %v306, 2147483648
    %v309 = vmul.f32 %v308, 1.442695
    %v310 = vpow.pop %v309
    %v311 = vadd.f32 %v310, 1.0
    %v312 = vrcp.pop %v311
    %v313 = vmul.f32 1.0, %v312
    %v314 = vtanh.pop %v307
    %v315 = vxor.u32 %v307, 2147483648
    %v316 = vmul.f32 %v315, 1.442695
    %v317 = vpow.pop %v316
    %v318 = vadd.f32 %v317, 1.0
    %v319 = vrcp.pop %v318
    %v320 = vmul.f32 1.0, %v319
    %v321 = vmul.f32 %v313, 0.0
    %v322 = vmul.f32 %v313, %v314
    %324 = vrot.lane.b32.xlu0 %v322, 64
    %v325 = vpop.permute.xlu0 %324
    %v327 = vadd.f32 %v321, %v325
    %v328 = vtanh.pop %v327
    %v329 = vmul.f32 %v320, %v328
    %331 = vrot.lane.b32.xlu0 %v329, 64
    %v332 = vpop.permute.xlu0 %331
    %334 = vst.msk [vmem:[#allocation3] sm:$0xff] %vm106, %v332
    %335 = vrot.lane.b32.xlu0 %v329, 32
    %v336 = vpop.permute.xlu0 %335
    %s338 = scalar_lea.vmem [#allocation4], 56
    %339 = vst.msk [vmem:[%s338] sm:$0xff] %vm106, %v336
    %s340 = smul.u32 1, 2
    %s341 = smul.addr %s340, 8
    %s342 = scalar_lea.vmem [#allocation2], %s341
    %v343 = vld [vmem:[%s342] sm:$0xff]
    %v344 = vld [vmem:[%s342 + $0x8] sm:$0xff]
    %v345 = vpack.c.bf16 %v329, %v329
    %347 = vrot.lane.b32.xlu0 %v345, 64
    %v348 = vpop.permute.xlu0 %347
    %v350 = vsel %vm261, %v348, 0
    %352 = vmatprep.subr.bf16.mxu0 %v246
    %353 = vmatpush1.bf16.msra.mxu0 %v245
    %354 = vmatprep.subr.bf16.mxu0 %v248
    %355 = vmatpush1.bf16.msra.mxu0 %v247
    %356 = vmatprep.subr.bf16.mxu0 %v250
    %357 = vmatpush1.bf16.msra.mxu0 %v249
    %358 = vmatprep.subr.bf16.mxu0 %v252
    %359 = vmatpush1.bf16.msra.mxu0 %v251
    %360 = vmatprep.subr.bf16.mxu0 0
    %361 = vmatpush1.bf16.msra.mxu0 0
    %362 = vmatprep.subr.bf16.mxu0 0
    %363 = vmatpush1.bf16.msra.mxu0 0
    %364 = vmatprep.subr.bf16.mxu0 0
    %365 = vmatpush1.bf16.msra.mxu0 0
    %366 = vmatprep.subr.bf16.mxu0 0
    %367 = vmatpush1.bf16.msra.mxu0 0
    %368 = vmatprep.subr.bf16.mxu0 0
    %369 = vmatpush1.bf16.msra.mxu0 0
    %370 = vmatprep.subr.bf16.mxu0 0
    %371 = vmatpush1.bf16.msra.mxu0 0
    %372 = vmatprep.subr.bf16.mxu0 0
    %373 = vmatpush1.bf16.msra.mxu0 0
    %374 = vmatprep.subr.bf16.mxu0 0
    %375 = vmatpush1.bf16.msra.mxu0 0
    %376 = vmatprep.subr.bf16.mxu0 0
    %377 = vmatpush1.bf16.msra.mxu0 0
    %378 = vmatprep.subr.bf16.mxu0 0
    %379 = vmatpush1.bf16.msra.mxu0 0
    %380 = vmatprep.subr.bf16.mxu0 0
    %381 = vmatpush1.bf16.msra.mxu0 0
    %382 = vmatprep.subr.bf16.mxu0 0
    %383 = vmatpush1.bf16.msra.mxu0 0
    %384 = vmatprep.mubr.bf16.mxu0 0
    %385 = vmatmul.mubr.bf16.gmra.mrb[0].mxu0 %v350
    %v386 = vpop.f32.mrb[0].mxu0
    %v387 = vadd.f32 0.0, %v386
    %v388 = vpop.f32.mrb[0].mxu0
    %v389 = vadd.f32 0.0, %v388
    %v390 = vpop.f32.mrb[0].mxu0
    %v391 = vpop.f32.mrb[0].mxu0
    %392 = vdwg.mxu0
    %v393 = vadd.f32 %v343, %v387
    %v394 = vadd.f32 %v344, %v389
    %v395 = vxor.u32 %v393, 2147483648
    %v396 = vmul.f32 %v395, 1.442695
    %v397 = vpow.pop %v396
    %v398 = vadd.f32 %v397, 1.0
    %v399 = vrcp.pop %v398
    %v400 = vmul.f32 1.0, %v399
    %v401 = vtanh.pop %v394
    %v402 = vxor.u32 %v394, 2147483648
    %v403 = vmul.f32 %v402, 1.442695
    %v404 = vpow.pop %v403
    %v405 = vadd.f32 %v404, 1.0
    %v406 = vrcp.pop %v405
    %v407 = vmul.f32 1.0, %v406
    %v408 = vmul.f32 %v400, %v327
    %v409 = vmul.f32 %v400, %v401
    %411 = vrot.lane.b32.xlu0 %v409, 64
    %v412 = vpop.permute.xlu0 %411
    %v414 = vadd.f32 %v408, %v412
    %v415 = vtanh.pop %v414
    %v416 = vmul.f32 %v407, %v415
    %418 = vrot.lane.b32.xlu0 %v416, 64
    %v419 = vpop.permute.xlu0 %418
    %s421 = scalar_lea.vmem [#allocation3], 8
    %422 = vst.msk [vmem:[%s421] sm:$0xff] %vm106, %v419
    %423 = vrot.lane.b32.xlu0 %v416, 32
    %v424 = vpop.permute.xlu0 %423
    %s426 = scalar_lea.vmem [#allocation4], 48
    %427 = vst.msk [vmem:[%s426] sm:$0xff] %vm106, %v424
    %s428 = smul.u32 2, 2
    %s429 = smul.addr %s428, 8
    %s430 = scalar_lea.vmem [#allocation2], %s429
    %v431 = vld [vmem:[%s430] sm:$0xff]
    %v432 = vld [vmem:[%s430 + $0x8] sm:$0xff]
    %v433 = vpack.c.bf16 %v416, %v416
    %435 = vrot.lane.b32.xlu0 %v433, 64
    %v436 = vpop.permute.xlu0 %435
    %v438 = vsel %vm261, %v436, 0
    %440 = vmatprep.subr.bf16.mxu0 %v246
    %441 = vmatpush1.bf16.msra.mxu0 %v245
    %442 = vmatprep.subr.bf16.mxu0 %v248
    %443 = vmatpush1.bf16.msra.mxu0 %v247
    %444 = vmatprep.subr.bf16.mxu0 %v250
    %445 = vmatpush1.bf16.msra.mxu0 %v249
    %446 = vmatprep.subr.bf16.mxu0 %v252
    %447 = vmatpush1.bf16.msra.mxu0 %v251
    %448 = vmatprep.subr.bf16.mxu0 0
    %449 = vmatpush1.bf16.msra.mxu0 0
    %450 = vmatprep.subr.bf16.mxu0 0
    %451 = vmatpush1.bf16.msra.mxu0 0
    %452 = vmatprep.subr.bf16.mxu0 0
    %453 = vmatpush1.bf16.msra.mxu0 0
    %454 = vmatprep.subr.bf16.mxu0 0
    %455 = vmatpush1.bf16.msra.mxu0 0
    %456 = vmatprep.subr.bf16.mxu0 0
    %457 = vmatpush1.bf16.msra.mxu0 0
    %458 = vmatprep.subr.bf16.mxu0 0
    %459 = vmatpush1.bf16.msra.mxu0 0
    %460 = vmatprep.subr.bf16.mxu0 0
    %461 = vmatpush1.bf16.msra.mxu0 0
    %462 = vmatprep.subr.bf16.mxu0 0
    %463 = vmatpush1.bf16.msra.mxu0 0
    %464 = vmatprep.subr.bf16.mxu0 0
    %465 = vmatpush1.bf16.msra.mxu0 0
    %466 = vmatprep.subr.bf16.mxu0 0
    %467 = vmatpush1.bf16.msra.mxu0 0
    %468 = vmatprep.subr.bf16.mxu0 0
    %469 = vmatpush1.bf16.msra.mxu0 0
    %470 = vmatprep.subr.bf16.mxu0 0
    %471 = vmatpush1.bf16.msra.mxu0 0
    %472 = vmatprep.mubr.bf16.mxu0 0
    %473 = vmatmul.mubr.bf16.gmra.mrb[0].mxu0 %v438
    %v474 = vpop.f32.mrb[0].mxu0
    %v475 = vadd.f32 0.0, %v474
    %v476 = vpop.f32.mrb[0].mxu0
    %v477 = vadd.f32 0.0, %v476
    %v478 = vpop.f32.mrb[0].mxu0
    %v479 = vpop.f32.mrb[0].mxu0
    %480 = vdwg.mxu0
    %v481 = vadd.f32 %v431, %v475
    %v482 = vadd.f32 %v432, %v477
    %v483 = vxor.u32 %v481, 2147483648
    %v484 = vmul.f32 %v483, 1.442695
    %v485 = vpow.pop %v484
    %v486 = vadd.f32 %v485, 1.0
    %v487 = vrcp.pop %v486
    %v488 = vmul.f32 1.0, %v487
    %v489 = vtanh.pop %v482
    %v490 = vxor.u32 %v482, 2147483648
    %v491 = vmul.f32 %v490, 1.442695
    %v492 = vpow.pop %v491
    %v493 = vadd.f32 %v492, 1.0
    %v494 = vrcp.pop %v493
    %v495 = vmul.f32 1.0, %v494
    %v496 = vmul.f32 %v488, %v414
    %v497 = vmul.f32 %v488, %v489
    %499 = vrot.lane.b32.xlu0 %v497, 64
    %v500 = vpop.permute.xlu0 %499
    %v502 = vadd.f32 %v496, %v500
    %v503 = vtanh.pop %v502
    %v504 = vmul.f32 %v495, %v503
    %506 = vrot.lane.b32.xlu0 %v504, 64
    %v507 = vpop.permute.xlu0 %506
    %s509 = scalar_lea.vmem [#allocation3], 16
    %510 = vst.msk [vmem:[%s509] sm:$0xff] %vm106, %v507
    %511 = vrot.lane.b32.xlu0 %v504, 32
    %v512 = vpop.permute.xlu0 %511
    %s514 = scalar_lea.vmem [#allocation4], 40
    %515 = vst.msk [vmem:[%s514] sm:$0xff] %vm106, %v512
    %s516 = smul.u32 3, 2
    %s517 = smul.addr %s516, 8
    %s518 = scalar_lea.vmem [#allocation2], %s517
    %v519 = vld [vmem:[%s518] sm:$0xff]
    %v520 = vld [vmem:[%s518 + $0x8] sm:$0xff]
    %v521 = vpack.c.bf16 %v504, %v504
    %523 = vrot.lane.b32.xlu0 %v521, 64
    %v524 = vpop.permute.xlu0 %523
    %v526 = vsel %vm261, %v524, 0
    %528 = vmatprep.subr.bf16.mxu0 %v246
    %529 = vmatpush1.bf16.msra.mxu0 %v245
    %530 = vmatprep.subr.bf16.mxu0 %v248
    %531 = vmatpush1.bf16.msra.mxu0 %v247
    %532 = vmatprep.subr.bf16.mxu0 %v250
    %533 = vmatpush1.bf16.msra.mxu0 %v249
    %534 = vmatprep.subr.bf16.mxu0 %v252
    %535 = vmatpush1.bf16.msra.mxu0 %v251
    %536 = vmatprep.subr.bf16.mxu0 0
    %537 = vmatpush1.bf16.msra.mxu0 0
    %538 = vmatprep.subr.bf16.mxu0 0
    %539 = vmatpush1.bf16.msra.mxu0 0
    %540 = vmatprep.subr.bf16.mxu0 0
    %541 = vmatpush1.bf16.msra.mxu0 0
    %542 = vmatprep.subr.bf16.mxu0 0
    %543 = vmatpush1.bf16.msra.mxu0 0
    %544 = vmatprep.subr.bf16.mxu0 0
    %545 = vmatpush1.bf16.msra.mxu0 0
    %546 = vmatprep.subr.bf16.mxu0 0
    %547 = vmatpush1.bf16.msra.mxu0 0
    %548 = vmatprep.subr.bf16.mxu0 0
    %549 = vmatpush1.bf16.msra.mxu0 0
    %550 = vmatprep.subr.bf16.mxu0 0
    %551 = vmatpush1.bf16.msra.mxu0 0
    %552 = vmatprep.subr.bf16.mxu0 0
    %553 = vmatpush1.bf16.msra.mxu0 0
    %554 = vmatprep.subr.bf16.mxu0 0
    %555 = vmatpush1.bf16.msra.mxu0 0
    %556 = vmatprep.subr.bf16.mxu0 0
    %557 = vmatpush1.bf16.msra.mxu0 0
    %558 = vmatprep.subr.bf16.mxu0 0
    %559 = vmatpush1.bf16.msra.mxu0 0
    %560 = vmatprep.mubr.bf16.mxu0 0
    %561 = vmatmul.mubr.bf16.gmra.mrb[0].mxu0 %v526
    %v562 = vpop.f32.mrb[0].mxu0
    %v563 = vadd.f32 0.0, %v562
    %v564 = vpop.f32.mrb[0].mxu0
    %v565 = vadd.f32 0.0, %v564
    %v566 = vpop.f32.mrb[0].mxu0
    %v567 = vpop.f32.mrb[0].mxu0
    %568 = vdwg.mxu0
    %v569 = vadd.f32 %v519, %v563
    %v570 = vadd.f32 %v520, %v565
    %v571 = vxor.u32 %v569, 2147483648
    %v572 = vmul.f32 %v571, 1.442695
    %v573 = vpow.pop %v572
    %v574 = vadd.f32 %v573, 1.0
    %v575 = vrcp.pop %v574
    %v576 = vmul.f32 1.0, %v575
    %v577 = vtanh.pop %v570
    %v578 = vxor.u32 %v570, 2147483648
    %v579 = vmul.f32 %v578, 1.442695
    %v580 = vpow.pop %v579
    %v581 = vadd.f32 %v580, 1.0
    %v582 = vrcp.pop %v581
    %v583 = vmul.f32 1.0, %v582
    %v584 = vmul.f32 %v576, %v502
    %v585 = vmul.f32 %v576, %v577
    %587 = vrot.lane.b32.xlu0 %v585, 64
    %v588 = vpop.permute.xlu0 %587
    %v590 = vadd.f32 %v584, %v588
    %v591 = vtanh.pop %v590
    %v592 = vmul.f32 %v583, %v591
    %594 = vrot.lane.b32.xlu0 %v592, 64
    %v595 = vpop.permute.xlu0 %594
    %s597 = scalar_lea.vmem [#allocation3], 24
    %598 = vst.msk [vmem:[%s597] sm:$0xff] %vm106, %v595
    %599 = vrot.lane.b32.xlu0 %v592, 32
    %v600 = vpop.permute.xlu0 %599
    %s602 = scalar_lea.vmem [#allocation4], 32
    %603 = vst.msk [vmem:[%s602] sm:$0xff] %vm106, %v600
    %s604 = smul.u32 4, 2
    %s605 = smul.addr %s604, 8
    %s606 = scalar_lea.vmem [#allocation2], %s605
    %v607 = vld [vmem:[%s606] sm:$0xff]
    %v608 = vld [vmem:[%s606 + $0x8] sm:$0xff]
    %v609 = vpack.c.bf16 %v592, %v592
    %611 = vrot.lane.b32.xlu0 %v609, 64
    %v612 = vpop.permute.xlu0 %611
    %v614 = vsel %vm261, %v612, 0
    %616 = vmatprep.subr.bf16.mxu0 %v246
    %617 = vmatpush1.bf16.msra.mxu0 %v245
    %618 = vmatprep.subr.bf16.mxu0 %v248
    %619 = vmatpush1.bf16.msra.mxu0 %v247
    %620 = vmatprep.subr.bf16.mxu0 %v250
    %621 = vmatpush1.bf16.msra.mxu0 %v249
    %622 = vmatprep.subr.bf16.mxu0 %v252
    %623 = vmatpush1.bf16.msra.mxu0 %v251
    %624 = vmatprep.subr.bf16.mxu0 0
    %625 = vmatpush1.bf16.msra.mxu0 0
    %626 = vmatprep.subr.bf16.mxu0 0
    %627 = vmatpush1.bf16.msra.mxu0 0
    %628 = vmatprep.subr.bf16.mxu0 0
    %629 = vmatpush1.bf16.msra.mxu0 0
    %630 = vmatprep.subr.bf16.mxu0 0
    %631 = vmatpush1.bf16.msra.mxu0 0
    %632 = vmatprep.subr.bf16.mxu0 0
    %633 = vmatpush1.bf16.msra.mxu0 0
    %634 = vmatprep.subr.bf16.mxu0 0
    %635 = vmatpush1.bf16.msra.mxu0 0
    %636 = vmatprep.subr.bf16.mxu0 0
    %637 = vmatpush1.bf16.msra.mxu0 0
    %638 = vmatprep.subr.bf16.mxu0 0
    %639 = vmatpush1.bf16.msra.mxu0 0
    %640 = vmatprep.subr.bf16.mxu0 0
    %641 = vmatpush1.bf16.msra.mxu0 0
    %642 = vmatprep.subr.bf16.mxu0 0
    %643 = vmatpush1.bf16.msra.mxu0 0
    %644 = vmatprep.subr.bf16.mxu0 0
    %645 = vmatpush1.bf16.msra.mxu0 0
    %646 = vmatprep.subr.bf16.mxu0 0
    %647 = vmatpush1.bf16.msra.mxu0 0
    %648 = vmatprep.mubr.bf16.mxu0 0
    %649 = vmatmul.mubr.bf16.gmra.mrb[0].mxu0 %v614
    %v650 = vpop.f32.mrb[0].mxu0
    %v651 = vadd.f32 0.0, %v650
    %v652 = vpop.f32.mrb[0].mxu0
    %v653 = vadd.f32 0.0, %v652
    %v654 = vpop.f32.mrb[0].mxu0
    %v655 = vpop.f32.mrb[0].mxu0
    %656 = vdwg.mxu0
    %v657 = vadd.f32 %v607, %v651
    %v658 = vadd.f32 %v608, %v653
    %v659 = vxor.u32 %v657, 2147483648
    %v660 = vmul.f32 %v659, 1.442695
    %v661 = vpow.pop %v660
    %v662 = vadd.f32 %v661, 1.0
    %v663 = vrcp.pop %v662
    %v664 = vmul.f32 1.0, %v663
    %v665 = vtanh.pop %v658
    %v666 = vxor.u32 %v658, 2147483648
    %v667 = vmul.f32 %v666, 1.442695
    %v668 = vpow.pop %v667
    %v669 = vadd.f32 %v668, 1.0
    %v670 = vrcp.pop %v669
    %v671 = vmul.f32 1.0, %v670
    %v672 = vmul.f32 %v664, %v590
    %v673 = vmul.f32 %v664, %v665
    %675 = vrot.lane.b32.xlu0 %v673, 64
    %v676 = vpop.permute.xlu0 %675
    %v678 = vadd.f32 %v672, %v676
    %v679 = vtanh.pop %v678
    %v680 = vmul.f32 %v671, %v679
    %682 = vrot.lane.b32.xlu0 %v680, 64
    %v683 = vpop.permute.xlu0 %682
    %s685 = scalar_lea.vmem [#allocation3], 32
    %686 = vst.msk [vmem:[%s685] sm:$0xff] %vm106, %v683
    %687 = vrot.lane.b32.xlu0 %v680, 32
    %v688 = vpop.permute.xlu0 %687
    %s690 = scalar_lea.vmem [#allocation4], 24
    %691 = vst.msk [vmem:[%s690] sm:$0xff] %vm106, %v688
    %s692 = smul.u32 5, 2
    %s693 = smul.addr %s692, 8
    %s694 = scalar_lea.vmem [#allocation2], %s693
    %v695 = vld [vmem:[%s694] sm:$0xff]
    %v696 = vld [vmem:[%s694 + $0x8] sm:$0xff]
    %v697 = vpack.c.bf16 %v680, %v680
    %699 = vrot.lane.b32.xlu0 %v697, 64
    %v700 = vpop.permute.xlu0 %699
    %v702 = vsel %vm261, %v700, 0
    %704 = vmatprep.subr.bf16.mxu0 %v246
    %705 = vmatpush1.bf16.msra.mxu0 %v245
    %706 = vmatprep.subr.bf16.mxu0 %v248
    %707 = vmatpush1.bf16.msra.mxu0 %v247
    %708 = vmatprep.subr.bf16.mxu0 %v250
    %709 = vmatpush1.bf16.msra.mxu0 %v249
    %710 = vmatprep.subr.bf16.mxu0 %v252
    %711 = vmatpush1.bf16.msra.mxu0 %v251
    %712 = vmatprep.subr.bf16.mxu0 0
    %713 = vmatpush1.bf16.msra.mxu0 0
    %714 = vmatprep.subr.bf16.mxu0 0
    %715 = vmatpush1.bf16.msra.mxu0 0
    %716 = vmatprep.subr.bf16.mxu0 0
    %717 = vmatpush1.bf16.msra.mxu0 0
    %718 = vmatprep.subr.bf16.mxu0 0
    %719 = vmatpush1.bf16.msra.mxu0 0
    %720 = vmatprep.subr.bf16.mxu0 0
    %721 = vmatpush1.bf16.msra.mxu0 0
    %722 = vmatprep.subr.bf16.mxu0 0
    %723 = vmatpush1.bf16.msra.mxu0 0
    %724 = vmatprep.subr.bf16.mxu0 0
    %725 = vmatpush1.bf16.msra.mxu0 0
    %726 = vmatprep.subr.bf16.mxu0 0
    %727 = vmatpush1.bf16.msra.mxu0 0
    %728 = vmatprep.subr.bf16.mxu0 0
    %729 = vmatpush1.bf16.msra.mxu0 0
    %730 = vmatprep.subr.bf16.mxu0 0
    %731 = vmatpush1.bf16.msra.mxu0 0
    %732 = vmatprep.subr.bf16.mxu0 0
    %733 = vmatpush1.bf16.msra.mxu0 0
    %734 = vmatprep.subr.bf16.mxu0 0
    %735 = vmatpush1.bf16.msra.mxu0 0
    %736 = vmatprep.mubr.bf16.mxu0 0
    %737 = vmatmul.mubr.bf16.gmra.mrb[0].mxu0 %v702
    %v738 = vpop.f32.mrb[0].mxu0
    %v739 = vadd.f32 0.0, %v738
    %v740 = vpop.f32.mrb[0].mxu0
    %v741 = vadd.f32 0.0, %v740
    %v742 = vpop.f32.mrb[0].mxu0
    %v743 = vpop.f32.mrb[0].mxu0
    %744 = vdwg.mxu0
    %v745 = vadd.f32 %v695, %v739
    %v746 = vadd.f32 %v696, %v741
    %v747 = vxor.u32 %v745, 2147483648
    %v748 = vmul.f32 %v747, 1.442695
    %v749 = vpow.pop %v748
    %v750 = vadd.f32 %v749, 1.0
    %v751 = vrcp.pop %v750
    %v752 = vmul.f32 1.0, %v751
    %v753 = vtanh.pop %v746
    %v754 = vxor.u32 %v746, 2147483648
    %v755 = vmul.f32 %v754, 1.442695
    %v756 = vpow.pop %v755
    %v757 = vadd.f32 %v756, 1.0
    %v758 = vrcp.pop %v757
    %v759 = vmul.f32 1.0, %v758
    %v760 = vmul.f32 %v752, %v678
    %v761 = vmul.f32 %v752, %v753
    %763 = vrot.lane.b32.xlu0 %v761, 64
    %v764 = vpop.permute.xlu0 %763
    %v766 = vadd.f32 %v760, %v764
    %v767 = vtanh.pop %v766
    %v768 = vmul.f32 %v759, %v767
    %770 = vrot.lane.b32.xlu0 %v768, 64
    %v771 = vpop.permute.xlu0 %770
    %s773 = scalar_lea.vmem [#allocation3], 40
    %774 = vst.msk [vmem:[%s773] sm:$0xff] %vm106, %v771
    %775 = vrot.lane.b32.xlu0 %v768, 32
    %v776 = vpop.permute.xlu0 %775
    %s778 = scalar_lea.vmem [#allocation4], 16
    %779 = vst.msk [vmem:[%s778] sm:$0xff] %vm106, %v776
    %s780 = smul.u32 6, 2
    %s781 = smul.addr %s780, 8
    %s782 = scalar_lea.vmem [#allocation2], %s781
    %v783 = vld [vmem:[%s782] sm:$0xff]
    %v784 = vld [vmem:[%s782 + $0x8] sm:$0xff]
    %v785 = vpack.c.bf16 %v768, %v768
    %787 = vrot.lane.b32.xlu0 %v785, 64
    %v788 = vpop.permute.xlu0 %787
    %v790 = vsel %vm261, %v788, 0
    %792 = vmatprep.subr.bf16.mxu0 %v246
    %793 = vmatpush1.bf16.msra.mxu0 %v245
    %794 = vmatprep.subr.bf16.mxu0 %v248
    %795 = vmatpush1.bf16.msra.mxu0 %v247
    %796 = vmatprep.subr.bf16.mxu0 %v250
    %797 = vmatpush1.bf16.msra.mxu0 %v249
    %798 = vmatprep.subr.bf16.mxu0 %v252
    %799 = vmatpush1.bf16.msra.mxu0 %v251
    %800 = vmatprep.subr.bf16.mxu0 0
    %801 = vmatpush1.bf16.msra.mxu0 0
    %802 = vmatprep.subr.bf16.mxu0 0
    %803 = vmatpush1.bf16.msra.mxu0 0
    %804 = vmatprep.subr.bf16.mxu0 0
    %805 = vmatpush1.bf16.msra.mxu0 0
    %806 = vmatprep.subr.bf16.mxu0 0
    %807 = vmatpush1.bf16.msra.mxu0 0
    %808 = vmatprep.subr.bf16.mxu0 0
    %809 = vmatpush1.bf16.msra.mxu0 0
    %810 = vmatprep.subr.bf16.mxu0 0
    %811 = vmatpush1.bf16.msra.mxu0 0
    %812 = vmatprep.subr.bf16.mxu0 0
    %813 = vmatpush1.bf16.msra.mxu0 0
    %814 = vmatprep.subr.bf16.mxu0 0
    %815 = vmatpush1.bf16.msra.mxu0 0
    %816 = vmatprep.subr.bf16.mxu0 0
    %817 = vmatpush1.bf16.msra.mxu0 0
    %818 = vmatprep.subr.bf16.mxu0 0
    %819 = vmatpush1.bf16.msra.mxu0 0
    %820 = vmatprep.subr.bf16.mxu0 0
    %821 = vmatpush1.bf16.msra.mxu0 0
    %822 = vmatprep.subr.bf16.mxu0 0
    %823 = vmatpush1.bf16.msra.mxu0 0
    %824 = vmatprep.mubr.bf16.mxu0 0
    %825 = vmatmul.mubr.bf16.gmra.mrb[0].mxu0 %v790
    %v826 = vpop.f32.mrb[0].mxu0
    %v827 = vadd.f32 0.0, %v826
    %v828 = vpop.f32.mrb[0].mxu0
    %v829 = vadd.f32 0.0, %v828
    %v830 = vpop.f32.mrb[0].mxu0
    %v831 = vpop.f32.mrb[0].mxu0
    %832 = vdwg.mxu0
    %v833 = vadd.f32 %v783, %v827
    %v834 = vadd.f32 %v784, %v829
    %v835 = vxor.u32 %v833, 2147483648
    %v836 = vmul.f32 %v835, 1.442695
    %v837 = vpow.pop %v836
    %v838 = vadd.f32 %v837, 1.0
    %v839 = vrcp.pop %v838
    %v840 = vmul.f32 1.0, %v839
    %v841 = vtanh.pop %v834
    %v842 = vxor.u32 %v834, 2147483648
    %v843 = vmul.f32 %v842, 1.442695
    %v844 = vpow.pop %v843
    %v845 = vadd.f32 %v844, 1.0
    %v846 = vrcp.pop %v845
    %v847 = vmul.f32 1.0, %v846
    %v848 = vmul.f32 %v840, %v766
    %v849 = vmul.f32 %v840, %v841
    %851 = vrot.lane.b32.xlu0 %v849, 64
    %v852 = vpop.permute.xlu0 %851
    %v854 = vadd.f32 %v848, %v852
    %v855 = vtanh.pop %v854
    %v856 = vmul.f32 %v847, %v855
    %858 = vrot.lane.b32.xlu0 %v856, 64
    %v859 = vpop.permute.xlu0 %858
    %s861 = scalar_lea.vmem [#allocation3], 48
    %862 = vst.msk [vmem:[%s861] sm:$0xff] %vm106, %v859
    %863 = vrot.lane.b32.xlu0 %v856, 32
    %v864 = vpop.permute.xlu0 %863
    %s866 = scalar_lea.vmem [#allocation4], 8
    %867 = vst.msk [vmem:[%s866] sm:$0xff] %vm106, %v864
    %s868 = smul.u32 7, 2
    %s869 = smul.addr %s868, 8
    %s870 = scalar_lea.vmem [#allocation2], %s869
    %v871 = vld [vmem:[%s870] sm:$0xff]
    %v872 = vld [vmem:[%s870 + $0x8] sm:$0xff]
    %v873 = vpack.c.bf16 %v856, %v856
    %875 = vrot.lane.b32.xlu0 %v873, 64
    %v876 = vpop.permute.xlu0 %875
    %v878 = vsel %vm261, %v876, 0
    %880 = vmatprep.subr.bf16.mxu0 %v246
    %881 = vmatpush1.bf16.msra.mxu0 %v245
    %882 = vmatprep.subr.bf16.mxu0 %v248
    %883 = vmatpush1.bf16.msra.mxu0 %v247
    %884 = vmatprep.subr.bf16.mxu0 %v250
    %885 = vmatpush1.bf16.msra.mxu0 %v249
    %886 = vmatprep.subr.bf16.mxu0 %v252
    %887 = vmatpush1.bf16.msra.mxu0 %v251
    %888 = vmatprep.subr.bf16.mxu0 0
    %889 = vmatpush1.bf16.msra.mxu0 0
    %890 = vmatprep.subr.bf16.mxu0 0
    %891 = vmatpush1.bf16.msra.mxu0 0
    %892 = vmatprep.subr.bf16.mxu0 0
    %893 = vmatpush1.bf16.msra.mxu0 0
    %894 = vmatprep.subr.bf16.mxu0 0
    %895 = vmatpush1.bf16.msra.mxu0 0
    %896 = vmatprep.subr.bf16.mxu0 0
    %897 = vmatpush1.bf16.msra.mxu0 0
    %898 = vmatprep.subr.bf16.mxu0 0
    %899 = vmatpush1.bf16.msra.mxu0 0
    %900 = vmatprep.subr.bf16.mxu0 0
    %901 = vmatpush1.bf16.msra.mxu0 0
    %902 = vmatprep.subr.bf16.mxu0 0
    %903 = vmatpush1.bf16.msra.mxu0 0
    %904 = vmatprep.subr.bf16.mxu0 0
    %905 = vmatpush1.bf16.msra.mxu0 0
    %906 = vmatprep.subr.bf16.mxu0 0
    %907 = vmatpush1.bf16.msra.mxu0 0
    %908 = vmatprep.subr.bf16.mxu0 0
    %909 = vmatpush1.bf16.msra.mxu0 0
    %910 = vmatprep.subr.bf16.mxu0 0
    %911 = vmatpush1.bf16.msra.mxu0 0
    %912 = vmatprep.mubr.bf16.mxu0 0
    %913 = vmatmul.mubr.bf16.gmra.mrb[0].mxu0 %v878
    %v914 = vpop.f32.mrb[0].mxu0
    %v915 = vadd.f32 0.0, %v914
    %v916 = vpop.f32.mrb[0].mxu0
    %v917 = vadd.f32 0.0, %v916
    %v918 = vpop.f32.mrb[0].mxu0
    %v919 = vpop.f32.mrb[0].mxu0
    %920 = vdwg.mxu0
    %v921 = vadd.f32 %v871, %v915
    %v922 = vadd.f32 %v872, %v917
    %v923 = vxor.u32 %v921, 2147483648
    %v924 = vmul.f32 %v923, 1.442695
    %v925 = vpow.pop %v924
    %v926 = vadd.f32 %v925, 1.0
    %v927 = vrcp.pop %v926
    %v928 = vmul.f32 1.0, %v927
    %v929 = vtanh.pop %v922
    %v930 = vxor.u32 %v922, 2147483648
    %v931 = vmul.f32 %v930, 1.442695
    %v932 = vpow.pop %v931
    %v933 = vadd.f32 %v932, 1.0
    %v934 = vrcp.pop %v933
    %v935 = vmul.f32 1.0, %v934
    %v936 = vmul.f32 %v928, %v854
    %v937 = vmul.f32 %v928, %v929
    %939 = vrot.lane.b32.xlu0 %v937, 64
    %v940 = vpop.permute.xlu0 %939
    %v942 = vadd.f32 %v936, %v940
    %v943 = vtanh.pop %v942
    %v944 = vmul.f32 %v935, %v943
    %946 = vrot.lane.b32.xlu0 %v944, 64
    %v947 = vpop.permute.xlu0 %946
    %s949 = scalar_lea.vmem [#allocation3], 56
    %950 = vst.msk [vmem:[%s949] sm:$0xff] %vm106, %v947
    %951 = vrot.lane.b32.xlu0 %v944, 32
    %v952 = vpop.permute.xlu0 %951
    %954 = vst.msk [vmem:[#allocation4] sm:$0xff] %vm106, %v952
    %v955 = vld [vmem:[#allocation3] sm:$0xff]
    %v956 = vld [vmem:[#allocation3 + $0x8] sm:$0xff]
    %v957 = vld [vmem:[#allocation3 + $0x10] sm:$0xff]
    %v958 = vld [vmem:[#allocation3 + $0x18] sm:$0xff]
    %v959 = vld [vmem:[#allocation3 + $0x20] sm:$0xff]
    %v960 = vld [vmem:[#allocation3 + $0x28] sm:$0xff]
    %v961 = vld [vmem:[#allocation3 + $0x30] sm:$0xff]
    %v962 = vld [vmem:[#allocation3 + $0x38] sm:$0xff]
    %v963 = vpack.c.bf16 %v956, %v955
    %v964 = vpack.c.bf16 %v958, %v957
    %v965 = vpack.c.bf16 %v960, %v959
    %v966 = vpack.c.bf16 %v962, %v961
    %v967 = vld [vmem:[%s4] sm:$0xf]
    %v968 = vld [vmem:[%s4 + $0x4] sm:$0xf]
    %v969 = vld [vmem:[%s4 + $0x8] sm:$0xf]
    %v970 = vld [vmem:[%s4 + $0xc] sm:$0xf]
    %v971 = vld [vmem:[#allocation4] sm:$0xff]
    %v972 = vld [vmem:[#allocation4 + $0x8] sm:$0xff]
    %v973 = vld [vmem:[#allocation4 + $0x10] sm:$0xff]
    %v974 = vld [vmem:[#allocation4 + $0x18] sm:$0xff]
    %v975 = vld [vmem:[#allocation4 + $0x20] sm:$0xff]
    %v976 = vld [vmem:[#allocation4 + $0x28] sm:$0xff]
    %v977 = vld [vmem:[#allocation4 + $0x30] sm:$0xff]
    %v978 = vld [vmem:[#allocation4 + $0x38] sm:$0xff]
    %v979 = vpack.c.bf16 %v972, %v971
    %v980 = vpack.c.bf16 %v974, %v973
    %v981 = vpack.c.bf16 %v976, %v975
    %v982 = vpack.c.bf16 %v978, %v977
    %v983 = vld [vmem:[%s5] sm:$0xf]
    %v984 = vld [vmem:[%s5 + $0x4] sm:$0xf]
    %v985 = vld [vmem:[%s5 + $0x8] sm:$0xf]
    %v986 = vld [vmem:[%s5 + $0xc] sm:$0xf]
    %v991 = vunpack.c.l.b16 %v983
    %v992 = vunpack.c.l.b16 %v984
    %v993 = vunpack.c.l.b16 %v985
    %v994 = vunpack.c.l.b16 %v986
    %v995 = vpack.c.b16 %v992, %v991
    %v996 = vpack.c.b16 %v994, %v993
    %v1000 = vsel %vm106, %v979, 0
    %v1003 = vsel %vm106, %v980, 0
    %v1006 = vsel %vm106, %v981, 0
    %v1009 = vsel %vm106, %v982, 0
    %1011 = vmatprep.subr.bf16.mxu0 0
    %1012 = vmatpush1.bf16.msra.mxu0 %v995
    %1013 = vmatprep.subr.bf16.mxu0 0
    %1014 = vmatpush1.bf16.msra.mxu0 %v996
    %1015 = vmatprep.subr.bf16.mxu0 0
    %1016 = vmatpush1.bf16.msra.mxu0 0
    %1017 = vmatprep.subr.bf16.mxu0 0
    %1018 = vmatpush1.bf16.msra.mxu0 0
    %1019 = vmatprep.subr.bf16.mxu0 0
    %1020 = vmatpush1.bf16.msra.mxu0 0
    %1021 = vmatprep.subr.bf16.mxu0 0
    %1022 = vmatpush1.bf16.msra.mxu0 0
    %1023 = vmatprep.subr.bf16.mxu0 0
    %1024 = vmatpush1.bf16.msra.mxu0 0
    %1025 = vmatprep.subr.bf16.mxu0 0
    %1026 = vmatpush1.bf16.msra.mxu0 0
    %1027 = vmatprep.subr.bf16.mxu0 0
    %1028 = vmatpush1.bf16.msra.mxu0 0
    %1029 = vmatprep.subr.bf16.mxu0 0
    %1030 = vmatpush1.bf16.msra.mxu0 0
    %1031 = vmatprep.subr.bf16.mxu0 0
    %1032 = vmatpush1.bf16.msra.mxu0 0
    %1033 = vmatprep.subr.bf16.mxu0 0
    %1034 = vmatpush1.bf16.msra.mxu0 0
    %1035 = vmatprep.subr.bf16.mxu0 0
    %1036 = vmatpush1.bf16.msra.mxu0 0
    %1037 = vmatprep.subr.bf16.mxu0 0
    %1038 = vmatpush1.bf16.msra.mxu0 0
    %1039 = vmatprep.subr.bf16.mxu0 0
    %1040 = vmatpush1.bf16.msra.mxu0 0
    %1041 = vmatprep.subr.bf16.mxu0 0
    %1042 = vmatpush1.bf16.msra.mxu0 0
    %1043 = vmatprep.mubr.bf16.mxu0 0
    %1044 = vmatmul.mubr.bf16.gmra.mrb[0].mxu0 %v1000
    %v1045 = vpop.f32.mrb[0].mxu0
    %v1046 = vadd.f32 0.0, %v1045
    %v1047 = vpop.f32.mrb[0].mxu0
    %v1048 = vpop.f32.mrb[0].mxu0
    %v1049 = vadd.f32 0.0, %v1048
    %v1050 = vpop.f32.mrb[0].mxu0
    %1051 = vmatprep.mubr.bf16.mxu0 0
    %1052 = vmatmul.mubr.bf16.gmra.mrb[0].mxu0 %v1003
    %v1053 = vpop.f32.mrb[0].mxu0
    %v1054 = vadd.f32 0.0, %v1053
    %v1055 = vpop.f32.mrb[0].mxu0
    %v1056 = vpop.f32.mrb[0].mxu0
    %v1057 = vadd.f32 0.0, %v1056
    %v1058 = vpop.f32.mrb[0].mxu0
    %1059 = vmatprep.mubr.bf16.mxu0 0
    %1060 = vmatmul.mubr.bf16.gmra.mrb[0].mxu0 %v1006
    %v1061 = vpop.f32.mrb[0].mxu0
    %v1062 = vadd.f32 0.0, %v1061
    %v1063 = vpop.f32.mrb[0].mxu0
    %v1064 = vpop.f32.mrb[0].mxu0
    %v1065 = vadd.f32 0.0, %v1064
    %v1066 = vpop.f32.mrb[0].mxu0
    %1067 = vmatprep.mubr.bf16.mxu0 0
    %1068 = vmatmul.mubr.bf16.gmra.mrb[0].mxu0 %v1009
    %v1069 = vpop.f32.mrb[0].mxu0
    %v1070 = vadd.f32 0.0, %v1069
    %v1071 = vpop.f32.mrb[0].mxu0
    %v1072 = vpop.f32.mrb[0].mxu0
    %v1073 = vadd.f32 0.0, %v1072
    %v1074 = vpop.f32.mrb[0].mxu0
    %1075 = vdwg.mxu0
    %v1080 = vunpack.c.l.b16 %v967
    %v1081 = vunpack.c.l.b16 %v968
    %v1082 = vunpack.c.l.b16 %v969
    %v1083 = vunpack.c.l.b16 %v970
    %v1084 = vpack.c.b16 %v1081, %v1080
    %v1085 = vpack.c.b16 %v1083, %v1082
    %v1089 = vsel %vm106, %v963, 0
    %v1092 = vsel %vm106, %v964, 0
    %v1095 = vsel %vm106, %v965, 0
    %v1098 = vsel %vm106, %v966, 0
    %1100 = vmatprep.subr.bf16.mxu0 0
    %1101 = vmatpush1.bf16.msra.mxu0 %v1084
    %1102 = vmatprep.subr.bf16.mxu0 0
    %1103 = vmatpush1.bf16.msra.mxu0 %v1085
    %1104 = vmatprep.subr.bf16.mxu0 0
    %1105 = vmatpush1.bf16.msra.mxu0 0
    %1106 = vmatprep.subr.bf16.mxu0 0
    %1107 = vmatpush1.bf16.msra.mxu0 0
    %1108 = vmatprep.subr.bf16.mxu0 0
    %1109 = vmatpush1.bf16.msra.mxu0 0
    %1110 = vmatprep.subr.bf16.mxu0 0
    %1111 = vmatpush1.bf16.msra.mxu0 0
    %1112 = vmatprep.subr.bf16.mxu0 0
    %1113 = vmatpush1.bf16.msra.mxu0 0
    %1114 = vmatprep.subr.bf16.mxu0 0
    %1115 = vmatpush1.bf16.msra.mxu0 0
    %1116 = vmatprep.subr.bf16.mxu0 0
    %1117 = vmatpush1.bf16.msra.mxu0 0
    %1118 = vmatprep.subr.bf16.mxu0 0
    %1119 = vmatpush1.bf16.msra.mxu0 0
    %1120 = vmatprep.subr.bf16.mxu0 0
    %1121 = vmatpush1.bf16.msra.mxu0 0
    %1122 = vmatprep.subr.bf16.mxu0 0
    %1123 = vmatpush1.bf16.msra.mxu0 0
    %1124 = vmatprep.subr.bf16.mxu0 0
    %1125 = vmatpush1.bf16.msra.mxu0 0
    %1126 = vmatprep.subr.bf16.mxu0 0
    %1127 = vmatpush1.bf16.msra.mxu0 0
    %1128 = vmatprep.subr.bf16.mxu0 0
    %1129 = vmatpush1.bf16.msra.mxu0 0
    %1130 = vmatprep.subr.bf16.mxu0 0
    %1131 = vmatpush1.bf16.msra.mxu0 0
    %1132 = vmatprep.mubr.bf16.mxu0 0
    %1133 = vmatmul.mubr.bf16.gmra.mrb[0].mxu0 %v1089
    %v1134 = vpop.f32.mrb[0].mxu0
    %v1135 = vadd.f32 %v1046, %v1134
    %v1136 = vpop.f32.mrb[0].mxu0
    %v1137 = vpop.f32.mrb[0].mxu0
    %v1138 = vadd.f32 %v1049, %v1137
    %v1139 = vpop.f32.mrb[0].mxu0
    %1140 = vmatprep.mubr.bf16.mxu0 0
    %1141 = vmatmul.mubr.bf16.gmra.mrb[0].mxu0 %v1092
    %v1142 = vpop.f32.mrb[0].mxu0
    %v1143 = vadd.f32 %v1054, %v1142
    %v1144 = vpop.f32.mrb[0].mxu0
    %v1145 = vpop.f32.mrb[0].mxu0
    %v1146 = vadd.f32 %v1057, %v1145
    %v1147 = vpop.f32.mrb[0].mxu0
    %1148 = vmatprep.mubr.bf16.mxu0 0
    %1149 = vmatmul.mubr.bf16.gmra.mrb[0].mxu0 %v1095
    %v1150 = vpop.f32.mrb[0].mxu0
    %v1151 = vadd.f32 %v1062, %v1150
    %v1152 = vpop.f32.mrb[0].mxu0
    %v1153 = vpop.f32.mrb[0].mxu0
    %v1154 = vadd.f32 %v1065, %v1153
    %v1155 = vpop.f32.mrb[0].mxu0
    %1156 = vmatprep.mubr.bf16.mxu0 0
    %1157 = vmatmul.mubr.bf16.gmra.mrb[0].mxu0 %v1098
    %v1158 = vpop.f32.mrb[0].mxu0
    %v1159 = vadd.f32 %v1070, %v1158
    %v1160 = vpop.f32.mrb[0].mxu0
    %v1161 = vpop.f32.mrb[0].mxu0
    %v1162 = vadd.f32 %v1073, %v1161
    %v1163 = vpop.f32.mrb[0].mxu0
    %1164 = vdwg.mxu0
    %v1165 = vld [vmem:[%s6] sm:$0x1]
    %v1167 = vlaneseq
    %v1168 = vshrl.u32 %v1167, 7
    %v1169 = vsub.s32 0, %v1168
    %v1170 = vrot.slane %v1165, %v1169
    %v1172 = vadd.f32 %v1135, %v1170
    %v1173 = vadd.f32 %v1138, %v1170
    %v1174 = vadd.f32 %v1143, %v1170
    %v1175 = vadd.f32 %v1146, %v1170
    %v1176 = vadd.f32 %v1151, %v1170
    %v1177 = vadd.f32 %v1154, %v1170
    %v1178 = vadd.f32 %v1159, %v1170
    %v1179 = vadd.f32 %v1162, %v1170
    %1180 = vst [vmem:[#allocation8] sm:$0xff] %v1172
    %1181 = vst [vmem:[#allocation8 + $0x8] sm:$0xff] %v1173
    %1182 = vst [vmem:[#allocation8 + $0x10] sm:$0xff] %v1174
    %1183 = vst [vmem:[#allocation8 + $0x18] sm:$0xff] %v1175
    %1184 = vst [vmem:[#allocation8 + $0x20] sm:$0xff] %v1176
    %1185 = vst [vmem:[#allocation8 + $0x28] sm:$0xff] %v1177
    %1186 = vst [vmem:[#allocation8 + $0x30] sm:$0xff] %v1178
    %1187 = vst [vmem:[#allocation8 + $0x38] sm:$0xff] %v1179
    // Predicated region
    $region34: #{tpu_custom_call.1} parent=1 // pred_check
      _
    $region35: #{tpu_custom_call.1} parent=1 // pred_check_branch
      %1189 = sbr.rel (0) target = $region37
    $region36: #{tpu_custom_call.1} parent=1 // pred_region
      %s1191 = ssub.s32 1024, 1024
      %1192 = vsyncadd [#allocation7], %s1191
      %s1193 = sshll.u32 [#allocation8], 4
      %s1194 = int_to_ptr.vmem [resolvable:$true] %s1193
      %1199 = dma.vmem_to_hbm [thread:$0]  %s1194, 1024, %s7, [#allocation7], 128, 128, 8
    $region37: #{tpu_custom_call.1} parent=1 // pred_fallthru
      _
    // Predicated region
    $region38: #{tpu_custom_call.1} parent=1 // pred_check
      _
    $region39: #{tpu_custom_call.1} parent=1 // pred_check_branch
      %1201 = sbr.rel (0) target = $region41
    $region40: #{tpu_custom_call.1} parent=1 // pred_region
      %1202 = dma.done [#allocation7], 1024
    $region41: #{tpu_custom_call.1} parent=1 // pred_fallthru
      _
    %1203 = vsyncpa [#allocation6], 1
    %1204 = vsyncpa [#allocation7], 1

</llo_original>
